<compile_context>
chip_gen: v5e
topology: v5e:2x2
jax: 0.10.0
libtpu: 0.0.40
codegen_flags: <defaults>
</compile_context>

<pallas_src>
import functools

import jax
import jax.numpy as jnp
from jax import lax
import numpy as np
from jax.experimental import pallas as pl
from jax.experimental.pallas import tpu as pltpu


def _leaky(x, slope=0.1):
    return jnp.where(x > 0, x, slope * x)


def _write_patches(src, p_ref, out_len, W, P, keep_l, keep_r):
    """Write the 9 im2col taps of a 3x3 SAME conv into the patches scratch.

    src     : (Cin, out_len + 2*P) flat input (zero halos / gaps included).
              May be a VMEM ref (conv1) or a register value (conv2).
    p_ref   : (9*Cin, >= out_len) VMEM scratch in the conv matmul dtype.
    keep_l  : (1, out_len) bool, False where column == 0     (dw = -1 wrap).
    keep_r  : (1, out_len) bool, False where column == W - 1 (dw = +1 wrap).
    """
    C = src.shape[0]
    idx = 0
    for dh in (-1, 0, 1):
        for dw in (-1, 0, 1):
            s = dh * W + dw
            t = src[:, P + s: P + s + out_len]
            if dw == -1:
                t = jnp.where(keep_l, t, 0)
            elif dw == 1:
                t = jnp.where(keep_r, t, 0)
            p_ref[idx * C:(idx + 1) * C, :out_len] = t.astype(p_ref.dtype)
            idx += 1


def rcab_kernel(x_ref, w1_ref, b1_ref, w2_ref, b2_ref,
                wa_ref, ba_ref, wb_ref, bb_ref,
                out_ref, xext_ref, p_ref, *, W):
    NB, C, HW = x_ref.shape
    P = W + 1                        # flat halo: one row + one pixel per side
    G = 2 * W                        # inter-image zero gap (mult. of W, >= P)
    S = HW + G                       # per-image lane stride in the flat buffer
    L_tot = xext_ref.shape[1]        # 4*P + NB*HW + (NB-1)*G
    L1 = L_tot - 2 * P               # conv1 evaluated over flat [P, L_tot - P)
    L2 = NB * HW + (NB - 1) * G      # conv2 evaluated over flat [2P, 2P + L2)

    # ---- hoisted per-lane indices / masks (shared by all taps & images) ----
    i1 = lax.broadcasted_iota(jnp.int32, (1, L1), 1)   # conv1 output index
    col1 = (i1 + (W - 1)) % W                          # column of flat pos P+i
    keep_l1 = col1 >= 1
    keep_r1 = col1 <= W - 2
    u1 = i1 - P                                        # offset from 1st interior
    interior1 = (u1 >= 0) & ((u1 % S) < HW)

    i2 = lax.broadcasted_iota(jnp.int32, (1, L2), 1)   # conv2 output index
    col2 = i2 % W
    keep_l2 = col2 >= 1
    keep_r2 = col2 <= W - 2

    w1 = w1_ref[...]
    w2 = w2_ref[...]
    b1 = b1_ref[...]
    b2 = b2_ref[...]
    wa = wa_ref[...]
    ba = ba_ref[...]
    wb = wb_ref[...]
    bb = bb_ref[...]

    # ---- stage NB images into one flat, zero-haloed "tall" buffer (VMEM) ----
    # (No HBM pre-pad; gaps/halos must be exact zeros for SAME padding.)
    xext_ref[...] = jnp.zeros(xext_ref.shape, xext_ref.dtype)
    for b in range(NB):
        base = 2 * P + b * S
        xext_ref[:, base: base + HW] = x_ref[b].astype(xext_ref.dtype)

    # ---- conv1 (+bias, LeakyReLU): ONE matmul for the whole image block -----
    _write_patches(xext_ref, p_ref, L1, W, P, keep_l1, keep_r1)
    h1 = jnp.dot(w1, p_ref[...], preferred_element_type=jnp.float32) + b1
    h1 = _leaky(h1)
    h1 = jnp.where(interior1, h1, 0.0)   # halo / gap -> exact zero pad for conv2
    h1 = h1.astype(xext_ref.dtype)       # single cast before the 9 tap slices

    # ---- conv2 (+bias): ONE matmul for the whole image block ----------------
    _write_patches(h1, p_ref, L2, W, P, keep_l2, keep_r2)
    h2 = jnp.dot(w2, p_ref[:, :L2], preferred_element_type=jnp.float32) + b2

    # ---- CALayer (GAP -> 1x1 C->4 -> LeakyReLU -> 1x1 4->C -> sigmoid) ------
    # Tiny per-image tail; heavy matmuls above are already batch-fused.
    for b in range(NB):
        h2b = h2[:, b * S: b * S + HW]                            # (C, HW)
        gap = jnp.mean(h2b, axis=1, keepdims=True)                # (C, 1)
        y1 = _leaky(jnp.dot(wa, gap, preferred_element_type=jnp.float32) + ba)
        y2 = jax.nn.sigmoid(
            jnp.dot(wb, y1, preferred_element_type=jnp.float32) + bb)  # (C, 1)
        out_ref[b] = (h2b * y2 + x_ref[b]).astype(out_ref.dtype)


def rcab_pallas(x_nchw, params, *, conv_dtype=jnp.bfloat16, max_batch_block=8):
    """x_nchw: (N, C, H, W) float32. Returns (N, C, H, W) float32."""
    w1, b1, w2, b2, wd1, bd1, wd2, bd2 = params
    N, C, H, W = x_nchw.shape
    HW = H * W
    P = W + 1
    G = 2 * W

    # Images per grid step.  Lane-batching NB images keeps the MXU streaming;
    # capping NB at N//2 keeps the "parallel" grid axis length >= 2 so both
    # TensorCores get work on v7x (v5e/v6e have a single TC).
    cap = max(1, min(max_batch_block, N // 2)) if N > 1 else 1
    NB = 1
    for cand in range(cap, 0, -1):
        if N % cand == 0:
            NB = cand
            break

    L_tot = 4 * P + NB * HW + (NB - 1) * G     # flat haloed+gapped lane extent
    L1 = L_tot - 2 * P                         # conv1 / patches lane extent

    # bf16 staging only when C packs cleanly into sublanes; C=8 stays f32.
    stage_dtype = conv_dtype if C % 16 == 0 else jnp.float32

    # Reshape only -- no HBM pre-pad copy (kernel builds the halo in VMEM).
    x_flat = x_nchw.reshape(N, C, HW).astype(jnp.float32)

    # (3,3,Cin,Cout) HWIO -> (Cout, 9*Cin), tap-major (kh, kw) then ci.
    w1_2d = jnp.transpose(w1, (3, 0, 1, 2)).reshape(C, 9 * C).astype(conv_dtype)
    w2_2d = jnp.transpose(w2, (3, 0, 1, 2)).reshape(C, 9 * C).astype(conv_dtype)
    b1c = b1.reshape(C, 1).astype(jnp.float32)
    b2c = b2.reshape(C, 1).astype(jnp.float32)
    wa = wd1.T.astype(jnp.float32)              # (4, C)  1x1 conv C->4
    ba = bd1.reshape(4, 1).astype(jnp.float32)
    wb = wd2.T.astype(jnp.float32)              # (C, 4)  1x1 conv 4->C
    bb = bd2.reshape(C, 1).astype(jnp.float32)

    # Per-generation scoped-VMEM budget: raise above the small defaults on
    # v5e/v6e, stay <= ~48 MiB on v7x (64 MiB physical).
    try:
        vmem_cap = int(pltpu.get_tpu_info().vmem_capacity_bytes)
    except Exception:
        vmem_cap = 64 * 1024 * 1024
    vmem_limit = int(min(64 * 1024 * 1024, (vmem_cap * 3) // 4))

    full = lambda shape: pl.BlockSpec(shape, lambda n: (0,) * len(shape))
    kernel = functools.partial(rcab_kernel, W=W)

    out_flat = pl.pallas_call(
        kernel,
        out_shape=jax.ShapeDtypeStruct((N, C, HW), jnp.float32),
        grid_spec=pltpu.PrefetchScalarGridSpec(
            num_scalar_prefetch=0,
            grid=(N // NB,),
            in_specs=[
                pl.BlockSpec((NB, C, HW), lambda n: (n, 0, 0)),  # x (flat)
                full((C, 9 * C)),   # w1 (im2col)
                full((C, 1)),       # b1
                full((C, 9 * C)),   # w2 (im2col)
                full((C, 1)),       # b2
                full((4, C)),       # CA down-proj weight
                full((4, 1)),       # CA down-proj bias
                full((C, 4)),       # CA up-proj weight
                full((C, 1)),       # CA up-proj bias
            ],
            out_specs=pl.BlockSpec((NB, C, HW), lambda n: (n, 0, 0)),
            scratch_shapes=[
                pltpu.VMEM((C, L_tot), stage_dtype),    # flat haloed input
                pltpu.VMEM((9 * C, L1), conv_dtype),    # shared im2col patches
            ],
        ),
        compiler_params=pltpu.CompilerParams(
            dimension_semantics=("parallel",),
            vmem_limit_bytes=vmem_limit),
    )(x_flat, w1_2d, b1c, w2_2d, b2c, wa, ba, wb, bb)

    return out_flat.reshape(N, C, H, W)


def rcab_reference(x_nchw, params):
    """Pure-JAX f32 reference (mirrors the PyTorch forward), NCHW in/out."""
    w1, b1, w2, b2, wd1, bd1, wd2, bd2 = params
    x = jnp.transpose(x_nchw, (0, 2, 3, 1))  # NHWC
    dn = ('NHWC', 'HWIO', 'NHWC')
    h = lax.conv_general_dilated(x, w1, (1, 1), 'SAME',
                                 dimension_numbers=dn) + b1.reshape(1, 1, 1, -1)
    h = _leaky(h)
    h = lax.conv_general_dilated(h, w2, (1, 1), 'SAME',
                                 dimension_numbers=dn) + b2.reshape(1, 1, 1, -1)
    y = jnp.mean(h, axis=(1, 2), keepdims=True)                     # (N,1,1,C)
    y1 = _leaky(jnp.einsum('nijc,cd->nijd', y, wd1) + bd1)
    y2 = jax.nn.sigmoid(jnp.einsum('nijd,dc->nijc', y1, wd2) + bd2)
    out = h * y2 + x
    return jnp.transpose(out, (0, 3, 1, 2))


def init_params(key, n_feat):
    ks = jax.random.split(key, 8)
    s = 0.1
    w1 = s * jax.random.normal(ks[0], (3, 3, n_feat, n_feat), jnp.float32)
    b1 = s * jax.random.normal(ks[1], (n_feat,), jnp.float32)
    w2 = s * jax.random.normal(ks[2], (3, 3, n_feat, n_feat), jnp.float32)
    b2 = s * jax.random.normal(ks[3], (n_feat,), jnp.float32)
    wd1 = s * jax.random.normal(ks[4], (n_feat, 4), jnp.float32)  # 1x1 C->4
    bd1 = s * jax.random.normal(ks[5], (4,), jnp.float32)
    wd2 = s * jax.random.normal(ks[6], (4, n_feat), jnp.float32)  # 1x1 4->C
    bd2 = s * jax.random.normal(ks[7], (n_feat,), jnp.float32)
    return (w1, b1, w2, b2, wd1, bd1, wd2, bd2)


if __name__ == "__main__":
    key = jax.random.PRNGKey(0)
    k_x, k_p = jax.random.split(key)

    N, n_feat, H, W = 2, 8, 16, 16
    x = jax.random.normal(k_x, (N, n_feat, H, W), jnp.float32)  # NCHW, like PyTorch
    params = init_params(k_p, n_feat)

    out = jax.jit(rcab_pallas)(x, params)
    out = jax.block_until_ready(out)

    ref = jax.block_until_ready(rcab_reference(x, params))
    # bf16 conv matmuls (f32 accumulation) vs f32 reference -> loose tolerance.
    np.testing.assert_allclose(np.asarray(out), np.asarray(ref),
                               rtol=5e-2, atol=5e-2)

    print("KERNEL_OK")
</pallas_src>

<mosaic_0001>
module attributes {stable_mosaic.version = 11 : i64} {
  func.func @rcab_kernel(%arg0: i32, %arg1: memref<1x8x256xf32, #tpu.memory_space<vmem>>, %arg2: memref<8x72xbf16, #tpu.memory_space<vmem>>, %arg3: memref<8x1xf32, #tpu.memory_space<vmem>>, %arg4: memref<8x72xbf16, #tpu.memory_space<vmem>>, %arg5: memref<8x1xf32, #tpu.memory_space<vmem>>, %arg6: memref<4x8xf32, #tpu.memory_space<vmem>>, %arg7: memref<4x1xf32, #tpu.memory_space<vmem>>, %arg8: memref<8x4xf32, #tpu.memory_space<vmem>>, %arg9: memref<8x1xf32, #tpu.memory_space<vmem>>, %arg10: memref<1x8x256xf32, #tpu.memory_space<vmem>>, %arg11: memref<8x324xf32, #tpu.memory_space<vmem>>, %arg12: memref<72x290xbf16, #tpu.memory_space<vmem>>) attributes {dimension_semantics = [#tpu.dimension_semantics<parallel>], iteration_bounds = array<i64: 2>, scalar_prefetch = 0 : i64, scratch_operands = 2 : i64, tpu.core_type = #tpu.core_type<tc>, window_params = [{transform_indices = @transform_0, window_bounds = array<i64: 1, 8, 256>}, {pipeline_mode = #tpu.pipeline_mode<synchronous>, transform_indices = @transform_1, window_bounds = array<i64: 8, 72>}, {pipeline_mode = #tpu.pipeline_mode<synchronous>, transform_indices = @transform_2, window_bounds = array<i64: 8, 1>}, {pipeline_mode = #tpu.pipeline_mode<synchronous>, transform_indices = @transform_3, window_bounds = array<i64: 8, 72>}, {pipeline_mode = #tpu.pipeline_mode<synchronous>, transform_indices = @transform_4, window_bounds = array<i64: 8, 1>}, {pipeline_mode = #tpu.pipeline_mode<synchronous>, transform_indices = @transform_5, window_bounds = array<i64: 4, 8>}, {pipeline_mode = #tpu.pipeline_mode<synchronous>, transform_indices = @transform_6, window_bounds = array<i64: 4, 1>}, {pipeline_mode = #tpu.pipeline_mode<synchronous>, transform_indices = @transform_7, window_bounds = array<i64: 8, 4>}, {pipeline_mode = #tpu.pipeline_mode<synchronous>, transform_indices = @transform_8, window_bounds = array<i64: 8, 1>}, {transform_indices = @transform_9, window_bounds = array<i64: 1, 8, 256>}]} {
    %0 = tpu.iota {dimensions = array<i32: 1>} : vector<1x290xi32>
    %c15_i32 = arith.constant 15 : i32
    %1 = vector.broadcast %c15_i32 : i32 to vector<1x290xi32>
    %2 = arith.addi %0, %1 : vector<1x290xi32>
    %c16_i32 = arith.constant 16 : i32
    %c0_i32 = arith.constant 0 : i32
    %3 = arith.cmpi eq, %c16_i32, %c0_i32 : i32
    %c1_i32 = arith.constant 1 : i32
    %4 = arith.select %3, %c1_i32, %c16_i32 : i32
    %5 = vector.broadcast %4 : i32 to vector<1x290xi32>
    %6 = arith.remsi %2, %5 : vector<1x290xi32>
    %c0_i32_0 = arith.constant 0 : i32
    %7 = vector.broadcast %c0_i32_0 : i32 to vector<1x290xi32>
    %8 = arith.cmpi ne, %6, %7 : vector<1x290xi32>
    %c0_i32_1 = arith.constant 0 : i32
    %9 = vector.broadcast %c0_i32_1 : i32 to vector<1x290xi32>
    %10 = arith.cmpi slt, %6, %9 : vector<1x290xi32>
    %c0_i32_2 = arith.constant 0 : i32
    %11 = arith.cmpi slt, %4, %c0_i32_2 : i32
    %12 = vector.broadcast %11 : i1 to vector<1x290xi1>
    %13 = vector.broadcast %12 : vector<1x290xi1> to vector<1x290xi1>
    %14 = arith.xori %10, %13 : vector<1x290xi1>
    %15 = arith.andi %14, %8 : vector<1x290xi1>
    %16 = vector.broadcast %4 : i32 to vector<1x290xi32>
    %17 = arith.addi %6, %16 : vector<1x290xi32>
    %18 = arith.select %15, %17, %6 : vector<1x290xi1>, vector<1x290xi32>
    %c1_i32_3 = arith.constant 1 : i32
    %19 = vector.broadcast %c1_i32_3 : i32 to vector<1x290xi32>
    %20 = arith.cmpi sge, %18, %19 : vector<1x290xi32>
    %c14_i32 = arith.constant 14 : i32
    %21 = vector.broadcast %c14_i32 : i32 to vector<1x290xi32>
    %22 = arith.cmpi sle, %18, %21 : vector<1x290xi32>
    %c17_i32 = arith.constant 17 : i32
    %23 = vector.broadcast %c17_i32 : i32 to vector<1x290xi32>
    %24 = arith.subi %0, %23 : vector<1x290xi32>
    %c0_i32_4 = arith.constant 0 : i32
    %25 = vector.broadcast %c0_i32_4 : i32 to vector<1x290xi32>
    %26 = arith.cmpi sge, %24, %25 : vector<1x290xi32>
    %c288_i32 = arith.constant 288 : i32
    %c0_i32_5 = arith.constant 0 : i32
    %27 = arith.cmpi eq, %c288_i32, %c0_i32_5 : i32
    %c1_i32_6 = arith.constant 1 : i32
    %28 = arith.select %27, %c1_i32_6, %c288_i32 : i32
    %29 = vector.broadcast %28 : i32 to vector<1x290xi32>
    %30 = arith.remsi %24, %29 : vector<1x290xi32>
    %c0_i32_7 = arith.constant 0 : i32
    %31 = vector.broadcast %c0_i32_7 : i32 to vector<1x290xi32>
    %32 = arith.cmpi ne, %30, %31 : vector<1x290xi32>
    %c0_i32_8 = arith.constant 0 : i32
    %33 = vector.broadcast %c0_i32_8 : i32 to vector<1x290xi32>
    %34 = arith.cmpi slt, %30, %33 : vector<1x290xi32>
    %c0_i32_9 = arith.constant 0 : i32
    %35 = arith.cmpi slt, %28, %c0_i32_9 : i32
    %36 = vector.broadcast %35 : i1 to vector<1x290xi1>
    %37 = vector.broadcast %36 : vector<1x290xi1> to vector<1x290xi1>
    %38 = arith.xori %34, %37 : vector<1x290xi1>
    %39 = arith.andi %38, %32 : vector<1x290xi1>
    %40 = vector.broadcast %28 : i32 to vector<1x290xi32>
    %41 = arith.addi %30, %40 : vector<1x290xi32>
    %42 = arith.select %39, %41, %30 : vector<1x290xi1>, vector<1x290xi32>
    %c256_i32 = arith.constant 256 : i32
    %43 = vector.broadcast %c256_i32 : i32 to vector<1x290xi32>
    %44 = arith.cmpi slt, %42, %43 : vector<1x290xi32>
    %45 = arith.andi %26, %44 : vector<1x290xi1>
    %46 = tpu.iota {dimensions = array<i32: 1>} : vector<1x256xi32>
    %c16_i32_10 = arith.constant 16 : i32
    %c0_i32_11 = arith.constant 0 : i32
    %47 = arith.cmpi eq, %c16_i32_10, %c0_i32_11 : i32
    %c1_i32_12 = arith.constant 1 : i32
    %48 = arith.select %47, %c1_i32_12, %c16_i32_10 : i32
    %49 = vector.broadcast %48 : i32 to vector<1x256xi32>
    %50 = arith.remsi %46, %49 : vector<1x256xi32>
    %c0_i32_13 = arith.constant 0 : i32
    %51 = vector.broadcast %c0_i32_13 : i32 to vector<1x256xi32>
    %52 = arith.cmpi ne, %50, %51 : vector<1x256xi32>
    %c0_i32_14 = arith.constant 0 : i32
    %53 = vector.broadcast %c0_i32_14 : i32 to vector<1x256xi32>
    %54 = arith.cmpi slt, %50, %53 : vector<1x256xi32>
    %c0_i32_15 = arith.constant 0 : i32
    %55 = arith.cmpi slt, %48, %c0_i32_15 : i32
    %56 = vector.broadcast %55 : i1 to vector<1x256xi1>
    %57 = vector.broadcast %56 : vector<1x256xi1> to vector<1x256xi1>
    %58 = arith.xori %54, %57 : vector<1x256xi1>
    %59 = arith.andi %58, %52 : vector<1x256xi1>
    %60 = vector.broadcast %48 : i32 to vector<1x256xi32>
    %61 = arith.addi %50, %60 : vector<1x256xi32>
    %62 = arith.select %59, %61, %50 : vector<1x256xi1>, vector<1x256xi32>
    %c1_i32_16 = arith.constant 1 : i32
    %63 = vector.broadcast %c1_i32_16 : i32 to vector<1x256xi32>
    %64 = arith.cmpi sge, %62, %63 : vector<1x256xi32>
    %c14_i32_17 = arith.constant 14 : i32
    %65 = vector.broadcast %c14_i32_17 : i32 to vector<1x256xi32>
    %66 = arith.cmpi sle, %62, %65 : vector<1x256xi32>
    %c0 = arith.constant 0 : index
    %c0_18 = arith.constant 0 : index
    %67 = vector.load %arg2[%c0, %c0_18] : memref<8x72xbf16, #tpu.memory_space<vmem>>, vector<8x72xbf16>
    %c0_19 = arith.constant 0 : index
    %c0_20 = arith.constant 0 : index
    %68 = vector.load %arg4[%c0_19, %c0_20] : memref<8x72xbf16, #tpu.memory_space<vmem>>, vector<8x72xbf16>
    %c0_21 = arith.constant 0 : index
    %c0_22 = arith.constant 0 : index
    %69 = vector.load %arg3[%c0_21, %c0_22] : memref<8x1xf32, #tpu.memory_space<vmem>>, vector<8x1xf32>
    %c0_23 = arith.constant 0 : index
    %c0_24 = arith.constant 0 : index
    %70 = vector.load %arg5[%c0_23, %c0_24] : memref<8x1xf32, #tpu.memory_space<vmem>>, vector<8x1xf32>
    %c0_25 = arith.constant 0 : index
    %c0_26 = arith.constant 0 : index
    %71 = vector.load %arg6[%c0_25, %c0_26] : memref<4x8xf32, #tpu.memory_space<vmem>>, vector<4x8xf32>
    %c0_27 = arith.constant 0 : index
    %c0_28 = arith.constant 0 : index
    %72 = vector.load %arg7[%c0_27, %c0_28] : memref<4x1xf32, #tpu.memory_space<vmem>>, vector<4x1xf32>
    %c0_29 = arith.constant 0 : index
    %c0_30 = arith.constant 0 : index
    %73 = vector.load %arg8[%c0_29, %c0_30] : memref<8x4xf32, #tpu.memory_space<vmem>>, vector<8x4xf32>
    %c0_31 = arith.constant 0 : index
    %c0_32 = arith.constant 0 : index
    %74 = vector.load %arg9[%c0_31, %c0_32] : memref<8x1xf32, #tpu.memory_space<vmem>>, vector<8x1xf32>
    %cst = arith.constant 0.000000e+00 : f32
    %75 = vector.broadcast %cst : f32 to vector<8x324xf32>
    %c0_33 = arith.constant 0 : index
    %c0_34 = arith.constant 0 : index
    %76 = vector.load %arg11[%c0_33, %c0_34] : memref<8x324xf32, #tpu.memory_space<vmem>>, vector<8x324xf32>
    tpu.vector_store %arg11[%c0_33, %c0_34], %75 {strides = array<i32>} : memref<8x324xf32, #tpu.memory_space<vmem>>, vector<8x324xf32>,
    %c0_35 = arith.constant 0 : index
    %c0_36 = arith.constant 0 : index
    %c0_37 = arith.constant 0 : index
    %77 = vector.load %arg1[%c0_35, %c0_36, %c0_37] : memref<1x8x256xf32, #tpu.memory_space<vmem>>, vector<1x8x256xf32>
    %78 = vector.shape_cast %77 : vector<1x8x256xf32> to vector<8x256xf32>
    %c0_38 = arith.constant 0 : index
    %c34 = arith.constant 34 : index
    %79 = vector.load %arg11[%c0_38, %c34] : memref<8x324xf32, #tpu.memory_space<vmem>>, vector<8x256xf32>
    tpu.vector_store %arg11[%c0_38, %c34], %78 {strides = array<i32>} : memref<8x324xf32, #tpu.memory_space<vmem>>, vector<8x256xf32>,
    %c0_39 = arith.constant 0 : index
    %c0_40 = arith.constant 0 : index
    %80 = vector.load %arg11[%c0_39, %c0_40] : memref<8x324xf32, #tpu.memory_space<vmem>>, vector<8x290xf32>
    %c0_i32_41 = arith.constant 0 : i32
    %81 = arith.sitofp %c0_i32_41 : i32 to f32
    %82 = vector.shape_cast %20 : vector<1x290xi1> to vector<1x290xi1>
    %83 = vector.broadcast %82 : vector<1x290xi1> to vector<8x290xi1>
    %84 = vector.broadcast %81 : f32 to vector<8x290xf32>
    %85 = arith.select %83, %80, %84 : vector<8x290xi1>, vector<8x290xf32>
    %86 = arith.truncf %85 : vector<8x290xf32> to vector<8x290xbf16>
    %c0_42 = arith.constant 0 : index
    %c0_43 = arith.constant 0 : index
    %87 = vector.load %arg12[%c0_42, %c0_43] : memref<72x290xbf16, #tpu.memory_space<vmem>>, vector<8x290xbf16>
    tpu.vector_store %arg12[%c0_42, %c0_43], %86 {strides = array<i32>} : memref<72x290xbf16, #tpu.memory_space<vmem>>, vector<8x290xbf16>,
    %c0_44 = arith.constant 0 : index
    %c1 = arith.constant 1 : index
    %88 = vector.load %arg11[%c0_44, %c1] : memref<8x324xf32, #tpu.memory_space<vmem>>, vector<8x290xf32>
    %89 = arith.truncf %88 : vector<8x290xf32> to vector<8x290xbf16>
    %c8 = arith.constant 8 : index
    %c0_45 = arith.constant 0 : index
    %90 = vector.load %arg12[%c8, %c0_45] : memref<72x290xbf16, #tpu.memory_space<vmem>>, vector<8x290xbf16>
    tpu.vector_store %arg12[%c8, %c0_45], %89 {strides = array<i32>} : memref<72x290xbf16, #tpu.memory_space<vmem>>, vector<8x290xbf16>,
    %c0_46 = arith.constant 0 : index
    %c2 = arith.constant 2 : index
    %91 = vector.load %arg11[%c0_46, %c2] : memref<8x324xf32, #tpu.memory_space<vmem>>, vector<8x290xf32>
    %c0_i32_47 = arith.constant 0 : i32
    %92 = arith.sitofp %c0_i32_47 : i32 to f32
    %93 = vector.shape_cast %22 : vector<1x290xi1> to vector<1x290xi1>
    %94 = vector.broadcast %93 : vector<1x290xi1> to vector<8x290xi1>
    %95 = vector.broadcast %92 : f32 to vector<8x290xf32>
    %96 = arith.select %94, %91, %95 : vector<8x290xi1>, vector<8x290xf32>
    %97 = arith.truncf %96 : vector<8x290xf32> to vector<8x290xbf16>
    %c16 = arith.constant 16 : index
    %c0_48 = arith.constant 0 : index
    %98 = vector.load %arg12[%c16, %c0_48] : memref<72x290xbf16, #tpu.memory_space<vmem>>, vector<8x290xbf16>
    tpu.vector_store %arg12[%c16, %c0_48], %97 {strides = array<i32>} : memref<72x290xbf16, #tpu.memory_space<vmem>>, vector<8x290xbf16>,
    %c0_49 = arith.constant 0 : index
    %c16_50 = arith.constant 16 : index
    %99 = vector.load %arg11[%c0_49, %c16_50] : memref<8x324xf32, #tpu.memory_space<vmem>>, vector<8x290xf32>
    %c0_i32_51 = arith.constant 0 : i32
    %100 = arith.sitofp %c0_i32_51 : i32 to f32
    %101 = vector.shape_cast %20 : vector<1x290xi1> to vector<1x290xi1>
    %102 = vector.broadcast %101 : vector<1x290xi1> to vector<8x290xi1>
    %103 = vector.broadcast %100 : f32 to vector<8x290xf32>
    %104 = arith.select %102, %99, %103 : vector<8x290xi1>, vector<8x290xf32>
    %105 = arith.truncf %104 : vector<8x290xf32> to vector<8x290xbf16>
    %c24 = arith.constant 24 : index
    %c0_52 = arith.constant 0 : index
    %106 = vector.load %arg12[%c24, %c0_52] : memref<72x290xbf16, #tpu.memory_space<vmem>>, vector<8x290xbf16>
    tpu.vector_store %arg12[%c24, %c0_52], %105 {strides = array<i32>} : memref<72x290xbf16, #tpu.memory_space<vmem>>, vector<8x290xbf16>,
    %c0_53 = arith.constant 0 : index
    %c17 = arith.constant 17 : index
    %107 = vector.load %arg11[%c0_53, %c17] : memref<8x324xf32, #tpu.memory_space<vmem>>, vector<8x290xf32>
    %108 = arith.truncf %107 : vector<8x290xf32> to vector<8x290xbf16>
    %c32 = arith.constant 32 : index
    %c0_54 = arith.constant 0 : index
    %109 = vector.load %arg12[%c32, %c0_54] : memref<72x290xbf16, #tpu.memory_space<vmem>>, vector<8x290xbf16>
    tpu.vector_store %arg12[%c32, %c0_54], %108 {strides = array<i32>} : memref<72x290xbf16, #tpu.memory_space<vmem>>, vector<8x290xbf16>,
    %c0_55 = arith.constant 0 : index
    %c18 = arith.constant 18 : index
    %110 = vector.load %arg11[%c0_55, %c18] : memref<8x324xf32, #tpu.memory_space<vmem>>, vector<8x290xf32>
    %c0_i32_56 = arith.constant 0 : i32
    %111 = arith.sitofp %c0_i32_56 : i32 to f32
    %112 = vector.shape_cast %22 : vector<1x290xi1> to vector<1x290xi1>
    %113 = vector.broadcast %112 : vector<1x290xi1> to vector<8x290xi1>
    %114 = vector.broadcast %111 : f32 to vector<8x290xf32>
    %115 = arith.select %113, %110, %114 : vector<8x290xi1>, vector<8x290xf32>
    %116 = arith.truncf %115 : vector<8x290xf32> to vector<8x290xbf16>
    %c40 = arith.constant 40 : index
    %c0_57 = arith.constant 0 : index
    %117 = vector.load %arg12[%c40, %c0_57] : memref<72x290xbf16, #tpu.memory_space<vmem>>, vector<8x290xbf16>
    tpu.vector_store %arg12[%c40, %c0_57], %116 {strides = array<i32>} : memref<72x290xbf16, #tpu.memory_space<vmem>>, vector<8x290xbf16>,
    %c0_58 = arith.constant 0 : index
    %c32_59 = arith.constant 32 : index
    %118 = vector.load %arg11[%c0_58, %c32_59] : memref<8x324xf32, #tpu.memory_space<vmem>>, vector<8x290xf32>
    %c0_i32_60 = arith.constant 0 : i32
    %119 = arith.sitofp %c0_i32_60 : i32 to f32
    %120 = vector.shape_cast %20 : vector<1x290xi1> to vector<1x290xi1>
    %121 = vector.broadcast %120 : vector<1x290xi1> to vector<8x290xi1>
    %122 = vector.broadcast %119 : f32 to vector<8x290xf32>
    %123 = arith.select %121, %118, %122 : vector<8x290xi1>, vector<8x290xf32>
    %124 = arith.truncf %123 : vector<8x290xf32> to vector<8x290xbf16>
    %c48 = arith.constant 48 : index
    %c0_61 = arith.constant 0 : index
    %125 = vector.load %arg12[%c48, %c0_61] : memref<72x290xbf16, #tpu.memory_space<vmem>>, vector<8x290xbf16>
    tpu.vector_store %arg12[%c48, %c0_61], %124 {strides = array<i32>} : memref<72x290xbf16, #tpu.memory_space<vmem>>, vector<8x290xbf16>,
    %c0_62 = arith.constant 0 : index
    %c33 = arith.constant 33 : index
    %126 = vector.load %arg11[%c0_62, %c33] : memref<8x324xf32, #tpu.memory_space<vmem>>, vector<8x290xf32>
    %127 = arith.truncf %126 : vector<8x290xf32> to vector<8x290xbf16>
    %c56 = arith.constant 56 : index
    %c0_63 = arith.constant 0 : index
    %128 = vector.load %arg12[%c56, %c0_63] : memref<72x290xbf16, #tpu.memory_space<vmem>>, vector<8x290xbf16>
    tpu.vector_store %arg12[%c56, %c0_63], %127 {strides = array<i32>} : memref<72x290xbf16, #tpu.memory_space<vmem>>, vector<8x290xbf16>,
    %c0_64 = arith.constant 0 : index
    %c34_65 = arith.constant 34 : index
    %129 = vector.load %arg11[%c0_64, %c34_65] : memref<8x324xf32, #tpu.memory_space<vmem>>, vector<8x290xf32>
    %c0_i32_66 = arith.constant 0 : i32
    %130 = arith.sitofp %c0_i32_66 : i32 to f32
    %131 = vector.shape_cast %22 : vector<1x290xi1> to vector<1x290xi1>
    %132 = vector.broadcast %131 : vector<1x290xi1> to vector<8x290xi1>
    %133 = vector.broadcast %130 : f32 to vector<8x290xf32>
    %134 = arith.select %132, %129, %133 : vector<8x290xi1>, vector<8x290xf32>
    %135 = arith.truncf %134 : vector<8x290xf32> to vector<8x290xbf16>
    %c64 = arith.constant 64 : index
    %c0_67 = arith.constant 0 : index
    %136 = vector.load %arg12[%c64, %c0_67] : memref<72x290xbf16, #tpu.memory_space<vmem>>, vector<8x290xbf16>
    tpu.vector_store %arg12[%c64, %c0_67], %135 {strides = array<i32>} : memref<72x290xbf16, #tpu.memory_space<vmem>>, vector<8x290xbf16>,
    %c0_68 = arith.constant 0 : index
    %c0_69 = arith.constant 0 : index
    %137 = vector.load %arg12[%c0_68, %c0_69] : memref<72x290xbf16, #tpu.memory_space<vmem>>, vector<72x290xbf16>
    %cst_70 = arith.constant dense<0.000000e+00> : vector<8x290xf32>
    %138 = tpu.matmul %67, %137, %cst_70 {dimension_numbers = #tpu.dot_dimension_numbers<[1], [0], [0], [1], [0, 0, 1, 1], [], []>} : vector<8x72xbf16>, vector<72x290xbf16>, vector<8x290xf32> -> vector<8x290xf32>
    %139 = vector.broadcast %69 : vector<8x1xf32> to vector<8x290xf32>
    %140 = arith.addf %138, %139 : vector<8x290xf32>
    %cst_71 = arith.constant 0.000000e+00 : f32
    %141 = vector.broadcast %cst_71 : f32 to vector<8x290xf32>
    %142 = arith.cmpf ogt, %140, %141 : vector<8x290xf32>
    %cst_72 = arith.constant 1.000000e-01 : f32
    %143 = vector.broadcast %cst_72 : f32 to vector<8x290xf32>
    %144 = arith.mulf %143, %140 : vector<8x290xf32>
    %145 = arith.select %142, %140, %144 : vector<8x290xi1>, vector<8x290xf32>
    %cst_73 = arith.constant 0.000000e+00 : f32
    %146 = vector.shape_cast %45 : vector<1x290xi1> to vector<1x290xi1>
    %147 = vector.broadcast %146 : vector<1x290xi1> to vector<8x290xi1>
    %148 = vector.broadcast %cst_73 : f32 to vector<8x290xf32>
    %149 = arith.select %147, %145, %148 : vector<8x290xi1>, vector<8x290xf32>
    %150 = vector.extract_strided_slice %149 {offsets = [0, 0], sizes = [8, 256], strides = [1, 1]} : vector<8x290xf32> to vector<8x256xf32>
    %c0_i32_74 = arith.constant 0 : i32
    %151 = arith.sitofp %c0_i32_74 : i32 to f32
    %152 = vector.shape_cast %64 : vector<1x256xi1> to vector<1x256xi1>
    %153 = vector.broadcast %152 : vector<1x256xi1> to vector<8x256xi1>
    %154 = vector.broadcast %151 : f32 to vector<8x256xf32>
    %155 = arith.select %153, %150, %154 : vector<8x256xi1>, vector<8x256xf32>
    %156 = arith.truncf %155 : vector<8x256xf32> to vector<8x256xbf16>
    %c0_75 = arith.constant 0 : index
    %c0_76 = arith.constant 0 : index
    %157 = vector.load %arg12[%c0_75, %c0_76] : memref<72x290xbf16, #tpu.memory_space<vmem>>, vector<8x256xbf16>
    tpu.vector_store %arg12[%c0_75, %c0_76], %156 {strides = array<i32>} : memref<72x290xbf16, #tpu.memory_space<vmem>>, vector<8x256xbf16>,
    %158 = vector.extract_strided_slice %149 {offsets = [0, 1], sizes = [8, 256], strides = [1, 1]} : vector<8x290xf32> to vector<8x256xf32>
    %159 = arith.truncf %158 : vector<8x256xf32> to vector<8x256xbf16>
    %c8_77 = arith.constant 8 : index
    %c0_78 = arith.constant 0 : index
    %160 = vector.load %arg12[%c8_77, %c0_78] : memref<72x290xbf16, #tpu.memory_space<vmem>>, vector<8x256xbf16>
    tpu.vector_store %arg12[%c8_77, %c0_78], %159 {strides = array<i32>} : memref<72x290xbf16, #tpu.memory_space<vmem>>, vector<8x256xbf16>,
    %161 = vector.extract_strided_slice %149 {offsets = [0, 2], sizes = [8, 256], strides = [1, 1]} : vector<8x290xf32> to vector<8x256xf32>
    %c0_i32_79 = arith.constant 0 : i32
    %162 = arith.sitofp %c0_i32_79 : i32 to f32
    %163 = vector.shape_cast %66 : vector<1x256xi1> to vector<1x256xi1>
    %164 = vector.broadcast %163 : vector<1x256xi1> to vector<8x256xi1>
    %165 = vector.broadcast %162 : f32 to vector<8x256xf32>
    %166 = arith.select %164, %161, %165 : vector<8x256xi1>, vector<8x256xf32>
    %167 = arith.truncf %166 : vector<8x256xf32> to vector<8x256xbf16>
    %c16_80 = arith.constant 16 : index
    %c0_81 = arith.constant 0 : index
    %168 = vector.load %arg12[%c16_80, %c0_81] : memref<72x290xbf16, #tpu.memory_space<vmem>>, vector<8x256xbf16>
    tpu.vector_store %arg12[%c16_80, %c0_81], %167 {strides = array<i32>} : memref<72x290xbf16, #tpu.memory_space<vmem>>, vector<8x256xbf16>,
    %169 = vector.extract_strided_slice %149 {offsets = [0, 16], sizes = [8, 256], strides = [1, 1]} : vector<8x290xf32> to vector<8x256xf32>
    %c0_i32_82 = arith.constant 0 : i32
    %170 = arith.sitofp %c0_i32_82 : i32 to f32
    %171 = vector.shape_cast %64 : vector<1x256xi1> to vector<1x256xi1>
    %172 = vector.broadcast %171 : vector<1x256xi1> to vector<8x256xi1>
    %173 = vector.broadcast %170 : f32 to vector<8x256xf32>
    %174 = arith.select %172, %169, %173 : vector<8x256xi1>, vector<8x256xf32>
    %175 = arith.truncf %174 : vector<8x256xf32> to vector<8x256xbf16>
    %c24_83 = arith.constant 24 : index
    %c0_84 = arith.constant 0 : index
    %176 = vector.load %arg12[%c24_83, %c0_84] : memref<72x290xbf16, #tpu.memory_space<vmem>>, vector<8x256xbf16>
    tpu.vector_store %arg12[%c24_83, %c0_84], %175 {strides = array<i32>} : memref<72x290xbf16, #tpu.memory_space<vmem>>, vector<8x256xbf16>,
    %177 = vector.extract_strided_slice %149 {offsets = [0, 17], sizes = [8, 256], strides = [1, 1]} : vector<8x290xf32> to vector<8x256xf32>
    %178 = arith.truncf %177 : vector<8x256xf32> to vector<8x256xbf16>
    %c32_85 = arith.constant 32 : index
    %c0_86 = arith.constant 0 : index
    %179 = vector.load %arg12[%c32_85, %c0_86] : memref<72x290xbf16, #tpu.memory_space<vmem>>, vector<8x256xbf16>
    tpu.vector_store %arg12[%c32_85, %c0_86], %178 {strides = array<i32>} : memref<72x290xbf16, #tpu.memory_space<vmem>>, vector<8x256xbf16>,
    %180 = vector.extract_strided_slice %149 {offsets = [0, 18], sizes = [8, 256], strides = [1, 1]} : vector<8x290xf32> to vector<8x256xf32>
    %c0_i32_87 = arith.constant 0 : i32
    %181 = arith.sitofp %c0_i32_87 : i32 to f32
    %182 = vector.shape_cast %66 : vector<1x256xi1> to vector<1x256xi1>
    %183 = vector.broadcast %182 : vector<1x256xi1> to vector<8x256xi1>
    %184 = vector.broadcast %181 : f32 to vector<8x256xf32>
    %185 = arith.select %183, %180, %184 : vector<8x256xi1>, vector<8x256xf32>
    %186 = arith.truncf %185 : vector<8x256xf32> to vector<8x256xbf16>
    %c40_88 = arith.constant 40 : index
    %c0_89 = arith.constant 0 : index
    %187 = vector.load %arg12[%c40_88, %c0_89] : memref<72x290xbf16, #tpu.memory_space<vmem>>, vector<8x256xbf16>
    tpu.vector_store %arg12[%c40_88, %c0_89], %186 {strides = array<i32>} : memref<72x290xbf16, #tpu.memory_space<vmem>>, vector<8x256xbf16>,
    %188 = vector.extract_strided_slice %149 {offsets = [0, 32], sizes = [8, 256], strides = [1, 1]} : vector<8x290xf32> to vector<8x256xf32>
    %c0_i32_90 = arith.constant 0 : i32
    %189 = arith.sitofp %c0_i32_90 : i32 to f32
    %190 = vector.shape_cast %64 : vector<1x256xi1> to vector<1x256xi1>
    %191 = vector.broadcast %190 : vector<1x256xi1> to vector<8x256xi1>
    %192 = vector.broadcast %189 : f32 to vector<8x256xf32>
    %193 = arith.select %191, %188, %192 : vector<8x256xi1>, vector<8x256xf32>
    %194 = arith.truncf %193 : vector<8x256xf32> to vector<8x256xbf16>
    %c48_91 = arith.constant 48 : index
    %c0_92 = arith.constant 0 : index
    %195 = vector.load %arg12[%c48_91, %c0_92] : memref<72x290xbf16, #tpu.memory_space<vmem>>, vector<8x256xbf16>
    tpu.vector_store %arg12[%c48_91, %c0_92], %194 {strides = array<i32>} : memref<72x290xbf16, #tpu.memory_space<vmem>>, vector<8x256xbf16>,
    %196 = vector.extract_strided_slice %149 {offsets = [0, 33], sizes = [8, 256], strides = [1, 1]} : vector<8x290xf32> to vector<8x256xf32>
    %197 = arith.truncf %196 : vector<8x256xf32> to vector<8x256xbf16>
    %c56_93 = arith.constant 56 : index
    %c0_94 = arith.constant 0 : index
    %198 = vector.load %arg12[%c56_93, %c0_94] : memref<72x290xbf16, #tpu.memory_space<vmem>>, vector<8x256xbf16>
    tpu.vector_store %arg12[%c56_93, %c0_94], %197 {strides = array<i32>} : memref<72x290xbf16, #tpu.memory_space<vmem>>, vector<8x256xbf16>,
    %199 = vector.extract_strided_slice %149 {offsets = [0, 34], sizes = [8, 256], strides = [1, 1]} : vector<8x290xf32> to vector<8x256xf32>
    %c0_i32_95 = arith.constant 0 : i32
    %200 = arith.sitofp %c0_i32_95 : i32 to f32
    %201 = vector.shape_cast %66 : vector<1x256xi1> to vector<1x256xi1>
    %202 = vector.broadcast %201 : vector<1x256xi1> to vector<8x256xi1>
    %203 = vector.broadcast %200 : f32 to vector<8x256xf32>
    %204 = arith.select %202, %199, %203 : vector<8x256xi1>, vector<8x256xf32>
    %205 = arith.truncf %204 : vector<8x256xf32> to vector<8x256xbf16>
    %c64_96 = arith.constant 64 : index
    %c0_97 = arith.constant 0 : index
    %206 = vector.load %arg12[%c64_96, %c0_97] : memref<72x290xbf16, #tpu.memory_space<vmem>>, vector<8x256xbf16>
    tpu.vector_store %arg12[%c64_96, %c0_97], %205 {strides = array<i32>} : memref<72x290xbf16, #tpu.memory_space<vmem>>, vector<8x256xbf16>,
    %c0_98 = arith.constant 0 : index
    %c0_99 = arith.constant 0 : index
    %207 = vector.load %arg12[%c0_98, %c0_99] : memref<72x290xbf16, #tpu.memory_space<vmem>>, vector<72x256xbf16>
    %cst_100 = arith.constant dense<0.000000e+00> : vector<8x256xf32>
    %208 = tpu.matmul %68, %207, %cst_100 {dimension_numbers = #tpu.dot_dimension_numbers<[1], [0], [0], [1], [0, 0, 1, 1], [], []>} : vector<8x72xbf16>, vector<72x256xbf16>, vector<8x256xf32> -> vector<8x256xf32>
    %209 = vector.broadcast %70 : vector<8x1xf32> to vector<8x256xf32>
    %210 = arith.addf %208, %209 : vector<8x256xf32>
    %cst_101 = arith.constant dense<0.000000e+00> : vector<8xf32>
    %211 = vector.multi_reduction <add>, %210, %cst_101 [1] : vector<8x256xf32> to vector<8xf32>
    %212 = vector.shape_cast %211 : vector<8xf32> to vector<8x1xf32>
    %cst_102 = arith.constant 2.560000e+02 : f32
    %213 = vector.broadcast %cst_102 : f32 to vector<8x1xf32>
    %214 = arith.divf %212, %213 : vector<8x1xf32>
    %cst_103 = arith.constant dense<0.000000e+00> : vector<4x1xf32>
    %215 = tpu.matmul %71, %214, %cst_103 {dimension_numbers = #tpu.dot_dimension_numbers<[1], [0], [0], [1], [0, 0, 1, 1], [], []>} : vector<4x8xf32>, vector<8x1xf32>, vector<4x1xf32> -> vector<4x1xf32>
    %216 = arith.addf %215, %72 : vector<4x1xf32>
    %cst_104 = arith.constant 0.000000e+00 : f32
    %217 = vector.broadcast %cst_104 : f32 to vector<4x1xf32>
    %218 = arith.cmpf ogt, %216, %217 : vector<4x1xf32>
    %cst_105 = arith.constant 1.000000e-01 : f32
    %219 = vector.broadcast %cst_105 : f32 to vector<4x1xf32>
    %220 = arith.mulf %219, %216 : vector<4x1xf32>
    %221 = arith.select %218, %216, %220 : vector<4x1xi1>, vector<4x1xf32>
    %cst_106 = arith.constant dense<0.000000e+00> : vector<8x1xf32>
    %222 = tpu.matmul %73, %221, %cst_106 {dimension_numbers = #tpu.dot_dimension_numbers<[1], [0], [0], [1], [0, 0, 1, 1], [], []>} : vector<8x4xf32>, vector<4x1xf32>, vector<8x1xf32> -> vector<8x1xf32>
    %223 = arith.addf %222, %74 : vector<8x1xf32>
    %224 = arith.negf %223 : vector<8x1xf32>
    %225 = math.exp %224 : vector<8x1xf32>
    %cst_107 = arith.constant 1.000000e+00 : f32
    %226 = vector.broadcast %cst_107 : f32 to vector<8x1xf32>
    %227 = arith.addf %226, %225 : vector<8x1xf32>
    %228 = arith.divf %226, %227 : vector<8x1xf32>
    %229 = vector.broadcast %228 : vector<8x1xf32> to vector<8x256xf32>
    %230 = arith.mulf %210, %229 : vector<8x256xf32>
    %c0_108 = arith.constant 0 : index
    %c0_109 = arith.constant 0 : index
    %c0_110 = arith.constant 0 : index
    %231 = vector.load %arg1[%c0_108, %c0_109, %c0_110] : memref<1x8x256xf32, #tpu.memory_space<vmem>>, vector<1x8x256xf32>
    %232 = vector.shape_cast %231 : vector<1x8x256xf32> to vector<8x256xf32>
    %233 = arith.addf %230, %232 : vector<8x256xf32>
    %c0_111 = arith.constant 0 : index
    %c0_112 = arith.constant 0 : index
    %c0_113 = arith.constant 0 : index
    %234 = vector.load %arg10[%c0_111, %c0_112, %c0_113] : memref<1x8x256xf32, #tpu.memory_space<vmem>>, vector<1x8x256xf32>
    %235 = vector.shape_cast %234 : vector<1x8x256xf32> to vector<8x256xf32>
    %236 = vector.shape_cast %233 : vector<8x256xf32> to vector<1x8x256xf32>
    tpu.vector_store %arg10[%c0_111, %c0_112, %c0_113], %236 {strides = array<i32>} : memref<1x8x256xf32, #tpu.memory_space<vmem>>, vector<1x8x256xf32>,
    return
  }
  func.func @transform_0(%arg0: i32) -> (i32, i32, i32) {
    %c0_i32 = arith.constant 0 : i32
    %c0_i32_0 = arith.constant 0 : i32
    %c0_i32_1 = arith.constant 0 : i32
    return %arg0, %c0_i32, %c0_i32_0 : i32, i32, i32
  }
  func.func @transform_1(%arg0: i32) -> (i32, i32) {
    %c0_i32 = arith.constant 0 : i32
    %c0_i32_0 = arith.constant 0 : i32
    %c0_i32_1 = arith.constant 0 : i32
    return %c0_i32, %c0_i32_0 : i32, i32
  }
  func.func @transform_2(%arg0: i32) -> (i32, i32) {
    %c0_i32 = arith.constant 0 : i32
    %c0_i32_0 = arith.constant 0 : i32
    %c0_i32_1 = arith.constant 0 : i32
    return %c0_i32, %c0_i32_0 : i32, i32
  }
  func.func @transform_3(%arg0: i32) -> (i32, i32) {
    %c0_i32 = arith.constant 0 : i32
    %c0_i32_0 = arith.constant 0 : i32
    %c0_i32_1 = arith.constant 0 : i32
    return %c0_i32, %c0_i32_0 : i32, i32
  }
  func.func @transform_4(%arg0: i32) -> (i32, i32) {
    %c0_i32 = arith.constant 0 : i32
    %c0_i32_0 = arith.constant 0 : i32
    %c0_i32_1 = arith.constant 0 : i32
    return %c0_i32, %c0_i32_0 : i32, i32
  }
  func.func @transform_5(%arg0: i32) -> (i32, i32) {
    %c0_i32 = arith.constant 0 : i32
    %c0_i32_0 = arith.constant 0 : i32
    %c0_i32_1 = arith.constant 0 : i32
    return %c0_i32, %c0_i32_0 : i32, i32
  }
  func.func @transform_6(%arg0: i32) -> (i32, i32) {
    %c0_i32 = arith.constant 0 : i32
    %c0_i32_0 = arith.constant 0 : i32
    %c0_i32_1 = arith.constant 0 : i32
    return %c0_i32, %c0_i32_0 : i32, i32
  }
  func.func @transform_7(%arg0: i32) -> (i32, i32) {
    %c0_i32 = arith.constant 0 : i32
    %c0_i32_0 = arith.constant 0 : i32
    %c0_i32_1 = arith.constant 0 : i32
    return %c0_i32, %c0_i32_0 : i32, i32
  }
  func.func @transform_8(%arg0: i32) -> (i32, i32) {
    %c0_i32 = arith.constant 0 : i32
    %c0_i32_0 = arith.constant 0 : i32
    %c0_i32_1 = arith.constant 0 : i32
    return %c0_i32, %c0_i32_0 : i32, i32
  }
  func.func @transform_9(%arg0: i32) -> (i32, i32, i32) {
    %c0_i32 = arith.constant 0 : i32
    %c0_i32_0 = arith.constant 0 : i32
    %c0_i32_1 = arith.constant 0 : i32
    return %arg0, %c0_i32, %c0_i32_0 : i32, i32, i32
  }
}

</mosaic_0001>

<llo_original>
// kernel: rcab_pallas.1
$region0: #{rcab_pallas.1}
  #allocation0 [shape = 'u32[]', space=smem, size = 0x4, offset = 0x4, fixed_abs, tag = 'smem constant byte address 0x4 - core index']
  #allocation1 [shape = 'u32[72,128]{1,0:T(1,128)}', space=vmem, size = 0x9000, scoped, tag = 'internal scratch']
  #allocation2 [shape = 'f32[8,324]{1,0:T(8,128)}', space=vmem, size = 0x3000, scoped, tag = 'scratch operand']
  #allocation3 [shape = 'bf16[72,290]{1,0:T(8,128)(2,1)}', space=vmem, size = 0xd800, scoped, tag = 'scratch operand']
  %s0 = inlined_call_operand.vmem [shape: f32[2,8,256], index: 0, kind: input, shape index: {}]
  %s1 = inlined_call_operand.vmem [shape: bf16[8,72], index: 1, kind: input, shape index: {}]
  %s2 = inlined_call_operand.vmem [shape: f32[8,1], index: 2, kind: input, shape index: {}]
  %s3 = inlined_call_operand.vmem [shape: bf16[8,72], index: 3, kind: input, shape index: {}]
  %s4 = inlined_call_operand.vmem [shape: f32[8,1], index: 4, kind: input, shape index: {}]
  %s5 = inlined_call_operand.vmem [shape: f32[4,8], index: 5, kind: input, shape index: {}]
  %s6 = inlined_call_operand.vmem [shape: f32[4,1], index: 6, kind: input, shape index: {}]
  %s7 = inlined_call_operand.vmem [shape: f32[8,4], index: 7, kind: input, shape index: {}]
  %s8 = inlined_call_operand.vmem [shape: f32[8,1], index: 8, kind: input, shape index: {}]
  %s9 = inlined_call_operand.vmem [shape: f32[2,8,256], index: 9, kind: output, shape index: {}]
  %s10 = sld [smem:[#allocation0]]
  $region69: #{rcab_pallas.1} parent=0
    _
  %s12 = ssub.s32 1, %s10
  %s13 = scalar_select 0, %s12, %s10
  loop: start=0, step=1, limit=4
  $region2: #{rcab_pallas.1} parent=0 // loop_pre_header
    _
  $region3: #{rcab_pallas.1} parent=0 // loop_header
    %s15 = sphi 0, %s19
    %p16 = scmp.ge.s32.totalorder %s15, 4
    %s25 = sphi 0, %s27
    %s28 = sphi 0, %s25
    %s29 = sphi 0, %s28
    %s45 = sphi 0, %s29
    %s49 = sphi 0, %s49
    %s51 = sphi 0, %s49
    %s52 = sphi 0, %s51
    %s66 = sphi 0, %s52
    %s70 = sphi 0, %s70
    %s72 = sphi 0, %s70
    %s73 = sphi 0, %s72
    %s87 = sphi 0, %s73
    %s91 = sphi 0, %s91
    %s93 = sphi 0, %s91
    %s94 = sphi 0, %s93
    %s108 = sphi 0, %s94
    %s112 = sphi 0, %s112
    %s114 = sphi 0, %s112
    %s115 = sphi 0, %s114
    %s129 = sphi 0, %s115
    %s133 = sphi 0, %s133
    %s135 = sphi 0, %s133
    %s136 = sphi 0, %s135
    %s150 = sphi 0, %s136
    %s154 = sphi 0, %s154
    %s156 = sphi 0, %s154
    %s157 = sphi 0, %s156
    %s171 = sphi 0, %s157
    %s175 = sphi 0, %s175
    %s177 = sphi 0, %s175
    %s178 = sphi 0, %s177
    %s192 = sphi 0, %s178
    %s196 = sphi 0, %s196
    %s198 = sphi 0, %s196
    %s199 = sphi 0, %s198
    %s213 = sphi 0, %s199
    %s219 = sphi 0, %s221
    %s222 = sphi 0, %s219
    %s223 = sphi 0, %s222
    %s239 = sphi 0, %s223
  $region4: #{rcab_pallas.1} parent=0 // loop_header_branch
    %18 = sbr.rel (%p16) target = $region8
  $region5: #{rcab_pallas.1} parent=0 // loop_body
    %s20 = ssub.s32 %s15, 1
    %s21 = ssub.s32 %s15, 2
    %s22 = sadd.s32 %s15, 1
    %s23 = ssub.s32 %s15, %s22
    %p24 = scmp.eq.s32.totalorder %s23, 0
    %s26 = sadd.s32 %s25, 1
    %s27 = scalar_select %p24, %s25, %s26
    %p30 = pneg %p24
    %p31 = scmp.eq.s32.totalorder %s15, 1
    %p32 = por %p30, %p31
    %p33 = scmp.ne.s32.totalorder %s25, %s28
    %p34 = scmp.eq.s32.totalorder %s15, 0
    %p35 = por %p33, %p34
    %p36 = scmp.ne.s32.totalorder %s25, %s28
    %p37 = scmp.eq.s32.totalorder %s20, 1
    %p38 = por %p36, %p37
    %p39 = scmp.ne.s32.totalorder %s28, %s29
    %p40 = scmp.eq.s32.totalorder %s20, 0
    %p41 = por %p39, %p40
    %p42 = scmp.ne.s32.totalorder %s28, %s29
    %p43 = scmp.eq.s32.totalorder %s21, 1
    %p44 = por %p42, %p43
    %p46 = scmp.ne.s32.totalorder %s29, %s45
    %p47 = scmp.eq.s32.totalorder %s21, 0
    %p48 = por %p46, %p47
    %s50 = sadd.s32 %s49, 1
    %p53 = scmp.eq.s32.totalorder %s15, 1
    %p54 = scmp.ne.s32.totalorder %s49, %s51
    %p55 = scmp.eq.s32.totalorder %s15, 0
    %p56 = por %p54, %p55
    %p57 = scmp.ne.s32.totalorder %s49, %s51
    %p58 = scmp.eq.s32.totalorder %s20, 1
    %p59 = por %p57, %p58
    %p60 = scmp.ne.s32.totalorder %s51, %s52
    %p61 = scmp.eq.s32.totalorder %s20, 0
    %p62 = por %p60, %p61
    %p63 = scmp.ne.s32.totalorder %s51, %s52
    %p64 = scmp.eq.s32.totalorder %s21, 1
    %p65 = por %p63, %p64
    %p67 = scmp.ne.s32.totalorder %s52, %s66
    %p68 = scmp.eq.s32.totalorder %s21, 0
    %p69 = por %p67, %p68
    %s71 = sadd.s32 %s70, 1
    %p74 = scmp.eq.s32.totalorder %s15, 1
    %p75 = scmp.ne.s32.totalorder %s70, %s72
    %p76 = scmp.eq.s32.totalorder %s15, 0
    %p77 = por %p75, %p76
    %p78 = scmp.ne.s32.totalorder %s70, %s72
    %p79 = scmp.eq.s32.totalorder %s20, 1
    %p80 = por %p78, %p79
    %p81 = scmp.ne.s32.totalorder %s72, %s73
    %p82 = scmp.eq.s32.totalorder %s20, 0
    %p83 = por %p81, %p82
    %p84 = scmp.ne.s32.totalorder %s72, %s73
    %p85 = scmp.eq.s32.totalorder %s21, 1
    %p86 = por %p84, %p85
    %p88 = scmp.ne.s32.totalorder %s73, %s87
    %p89 = scmp.eq.s32.totalorder %s21, 0
    %p90 = por %p88, %p89
    %s92 = sadd.s32 %s91, 1
    %p95 = scmp.eq.s32.totalorder %s15, 1
    %p96 = scmp.ne.s32.totalorder %s91, %s93
    %p97 = scmp.eq.s32.totalorder %s15, 0
    %p98 = por %p96, %p97
    %p99 = scmp.ne.s32.totalorder %s91, %s93
    %p100 = scmp.eq.s32.totalorder %s20, 1
    %p101 = por %p99, %p100
    %p102 = scmp.ne.s32.totalorder %s93, %s94
    %p103 = scmp.eq.s32.totalorder %s20, 0
    %p104 = por %p102, %p103
    %p105 = scmp.ne.s32.totalorder %s93, %s94
    %p106 = scmp.eq.s32.totalorder %s21, 1
    %p107 = por %p105, %p106
    %p109 = scmp.ne.s32.totalorder %s94, %s108
    %p110 = scmp.eq.s32.totalorder %s21, 0
    %p111 = por %p109, %p110
    %s113 = sadd.s32 %s112, 1
    %p116 = scmp.eq.s32.totalorder %s15, 1
    %p117 = scmp.ne.s32.totalorder %s112, %s114
    %p118 = scmp.eq.s32.totalorder %s15, 0
    %p119 = por %p117, %p118
    %p120 = scmp.ne.s32.totalorder %s112, %s114
    %p121 = scmp.eq.s32.totalorder %s20, 1
    %p122 = por %p120, %p121
    %p123 = scmp.ne.s32.totalorder %s114, %s115
    %p124 = scmp.eq.s32.totalorder %s20, 0
    %p125 = por %p123, %p124
    %p126 = scmp.ne.s32.totalorder %s114, %s115
    %p127 = scmp.eq.s32.totalorder %s21, 1
    %p128 = por %p126, %p127
    %p130 = scmp.ne.s32.totalorder %s115, %s129
    %p131 = scmp.eq.s32.totalorder %s21, 0
    %p132 = por %p130, %p131
    %s134 = sadd.s32 %s133, 1
    %p137 = scmp.eq.s32.totalorder %s15, 1
    %p138 = scmp.ne.s32.totalorder %s133, %s135
    %p139 = scmp.eq.s32.totalorder %s15, 0
    %p140 = por %p138, %p139
    %p141 = scmp.ne.s32.totalorder %s133, %s135
    %p142 = scmp.eq.s32.totalorder %s20, 1
    %p143 = por %p141, %p142
    %p144 = scmp.ne.s32.totalorder %s135, %s136
    %p145 = scmp.eq.s32.totalorder %s20, 0
    %p146 = por %p144, %p145
    %p147 = scmp.ne.s32.totalorder %s135, %s136
    %p148 = scmp.eq.s32.totalorder %s21, 1
    %p149 = por %p147, %p148
    %p151 = scmp.ne.s32.totalorder %s136, %s150
    %p152 = scmp.eq.s32.totalorder %s21, 0
    %p153 = por %p151, %p152
    %s155 = sadd.s32 %s154, 1
    %p158 = scmp.eq.s32.totalorder %s15, 1
    %p159 = scmp.ne.s32.totalorder %s154, %s156
    %p160 = scmp.eq.s32.totalorder %s15, 0
    %p161 = por %p159, %p160
    %p162 = scmp.ne.s32.totalorder %s154, %s156
    %p163 = scmp.eq.s32.totalorder %s20, 1
    %p164 = por %p162, %p163
    %p165 = scmp.ne.s32.totalorder %s156, %s157
    %p166 = scmp.eq.s32.totalorder %s20, 0
    %p167 = por %p165, %p166
    %p168 = scmp.ne.s32.totalorder %s156, %s157
    %p169 = scmp.eq.s32.totalorder %s21, 1
    %p170 = por %p168, %p169
    %p172 = scmp.ne.s32.totalorder %s157, %s171
    %p173 = scmp.eq.s32.totalorder %s21, 0
    %p174 = por %p172, %p173
    %s176 = sadd.s32 %s175, 1
    %p179 = scmp.eq.s32.totalorder %s15, 1
    %p180 = scmp.ne.s32.totalorder %s175, %s177
    %p181 = scmp.eq.s32.totalorder %s15, 0
    %p182 = por %p180, %p181
    %p183 = scmp.ne.s32.totalorder %s175, %s177
    %p184 = scmp.eq.s32.totalorder %s20, 1
    %p185 = por %p183, %p184
    %p186 = scmp.ne.s32.totalorder %s177, %s178
    %p187 = scmp.eq.s32.totalorder %s20, 0
    %p188 = por %p186, %p187
    %p189 = scmp.ne.s32.totalorder %s177, %s178
    %p190 = scmp.eq.s32.totalorder %s21, 1
    %p191 = por %p189, %p190
    %p193 = scmp.ne.s32.totalorder %s178, %s192
    %p194 = scmp.eq.s32.totalorder %s21, 0
    %p195 = por %p193, %p194
    %s197 = sadd.s32 %s196, 1
    %p200 = scmp.eq.s32.totalorder %s15, 1
    %p201 = scmp.ne.s32.totalorder %s196, %s198
    %p202 = scmp.eq.s32.totalorder %s15, 0
    %p203 = por %p201, %p202
    %p204 = scmp.ne.s32.totalorder %s196, %s198
    %p205 = scmp.eq.s32.totalorder %s20, 1
    %p206 = por %p204, %p205
    %p207 = scmp.ne.s32.totalorder %s198, %s199
    %p208 = scmp.eq.s32.totalorder %s20, 0
    %p209 = por %p207, %p208
    %p210 = scmp.ne.s32.totalorder %s198, %s199
    %p211 = scmp.eq.s32.totalorder %s21, 1
    %p212 = por %p210, %p211
    %p214 = scmp.ne.s32.totalorder %s199, %s213
    %p215 = scmp.eq.s32.totalorder %s21, 0
    %p216 = por %p214, %p215
    %s217 = ssub.s32 %s15, %s22
    %p218 = scmp.eq.s32.totalorder %s217, 0
    %s220 = sadd.s32 %s219, 1
    %s221 = scalar_select %p218, %s219, %s220
    %p224 = pneg %p218
    %p225 = scmp.eq.s32.totalorder %s15, 1
    %p226 = por %p224, %p225
    %p227 = scmp.ne.s32.totalorder %s219, %s222
    %p228 = scmp.eq.s32.totalorder %s15, 0
    %p229 = por %p227, %p228
    %p230 = scmp.ne.s32.totalorder %s219, %s222
    %p231 = scmp.eq.s32.totalorder %s20, 1
    %p232 = por %p230, %p231
    %p233 = scmp.ne.s32.totalorder %s222, %s223
    %p234 = scmp.eq.s32.totalorder %s20, 0
    %p235 = por %p233, %p234
    %p236 = scmp.ne.s32.totalorder %s222, %s223
    %p237 = scmp.eq.s32.totalorder %s21, 1
    %p238 = por %p236, %p237
    %p240 = scmp.ne.s32.totalorder %s223, %s239
    %p241 = scmp.eq.s32.totalorder %s21, 0
    %p242 = por %p240, %p241
    %p243 = scmp.le.s32.totalorder 1, %s15
    %p244 = scmp.lt.s32.totalorder %s15, 3
    %p245 = pnand %p243, %p244
    %p246 = pneg %p245
    // Predicated region
    $region9: #{rcab_pallas.1} parent=5 // pred_check
      _
    $region10: #{rcab_pallas.1} parent=5 // pred_check_branch
      %248 = sbr.rel (%p245) target = $region12
    $region11: #{rcab_pallas.1} parent=5 // pred_region
      %s249 = ssub.s32 %s15, 1
      // Predicated region
      $region13: #{rcab_pallas.1} parent=11 // pred_check
        %p250 = pneg %p62
      $region14: #{rcab_pallas.1} parent=11 // pred_check_branch
        %252 = sbr.rel (%p250) target = $region16
      $region15: #{rcab_pallas.1} parent=11 // pred_region
        _
      $region16: #{rcab_pallas.1} parent=11 // pred_fallthru
        _
      // Predicated region
      $region17: #{rcab_pallas.1} parent=11 // pred_check
        %p253 = pneg %p83
      $region18: #{rcab_pallas.1} parent=11 // pred_check_branch
        %255 = sbr.rel (%p253) target = $region20
      $region19: #{rcab_pallas.1} parent=11 // pred_region
        _
      $region20: #{rcab_pallas.1} parent=11 // pred_fallthru
        _
      // Predicated region
      $region21: #{rcab_pallas.1} parent=11 // pred_check
        %p256 = pneg %p104
      $region22: #{rcab_pallas.1} parent=11 // pred_check_branch
        %258 = sbr.rel (%p256) target = $region24
      $region23: #{rcab_pallas.1} parent=11 // pred_region
        _
      $region24: #{rcab_pallas.1} parent=11 // pred_fallthru
        _
      // Predicated region
      $region25: #{rcab_pallas.1} parent=11 // pred_check
        %p259 = pneg %p125
      $region26: #{rcab_pallas.1} parent=11 // pred_check_branch
        %261 = sbr.rel (%p259) target = $region28
      $region27: #{rcab_pallas.1} parent=11 // pred_region
        _
      $region28: #{rcab_pallas.1} parent=11 // pred_fallthru
        _
      // Predicated region
      $region29: #{rcab_pallas.1} parent=11 // pred_check
        %p262 = pneg %p146
      $region30: #{rcab_pallas.1} parent=11 // pred_check_branch
        %264 = sbr.rel (%p262) target = $region32
      $region31: #{rcab_pallas.1} parent=11 // pred_region
        _
      $region32: #{rcab_pallas.1} parent=11 // pred_fallthru
        _
      // Predicated region
      $region33: #{rcab_pallas.1} parent=11 // pred_check
        %p265 = pneg %p167
      $region34: #{rcab_pallas.1} parent=11 // pred_check_branch
        %267 = sbr.rel (%p265) target = $region36
      $region35: #{rcab_pallas.1} parent=11 // pred_region
        _
      $region36: #{rcab_pallas.1} parent=11 // pred_fallthru
        _
      // Predicated region
      $region37: #{rcab_pallas.1} parent=11 // pred_check
        %p268 = pneg %p188
      $region38: #{rcab_pallas.1} parent=11 // pred_check_branch
        %270 = sbr.rel (%p268) target = $region40
      $region39: #{rcab_pallas.1} parent=11 // pred_region
        _
      $region40: #{rcab_pallas.1} parent=11 // pred_fallthru
        _
      // Predicated region
      $region41: #{rcab_pallas.1} parent=11 // pred_check
        %p271 = pneg %p209
      $region42: #{rcab_pallas.1} parent=11 // pred_check_branch
        %273 = sbr.rel (%p271) target = $region44
      $region43: #{rcab_pallas.1} parent=11 // pred_region
        _
      $region44: #{rcab_pallas.1} parent=11 // pred_fallthru
        _
    $region12: #{rcab_pallas.1} parent=5 // pred_fallthru
      _
    %p274 = scmp.lt.s32.totalorder %s15, 2
    // Predicated region
    $region45: #{rcab_pallas.1} parent=5 // pred_check
      %p275 = pneg %p274
    $region46: #{rcab_pallas.1} parent=5 // pred_check_branch
      %277 = sbr.rel (%p275) target = $region48
    $region47: #{rcab_pallas.1} parent=5 // pred_region
      // Predicated region
      $region49: #{rcab_pallas.1} parent=47 // pred_check
        %p278 = pneg %p35
      $region50: #{rcab_pallas.1} parent=47 // pred_check_branch
        %280 = sbr.rel (%p278) target = $region52
      $region51: #{rcab_pallas.1} parent=47 // pred_region
        %p281 = scmp.lt.s32.totalorder %s15, 1
        %s282 = scalar_select %p281, %s15, 1
        %s283 = smul.addr %s282, 2
        %s284 = smul.addr %s283, 8
        %s285 = scalar_lea.vmem %s0, %s284
      $region52: #{rcab_pallas.1} parent=47 // pred_fallthru
        _
    $region48: #{rcab_pallas.1} parent=5 // pred_fallthru
      _
    %p286 = scmp.le.s32.totalorder 1, %s15
    %p287 = scmp.lt.s32.totalorder %s15, 3
    %p288 = pnand %p286, %p287
    %p289 = pneg %p288
    // Predicated region
    $region53: #{rcab_pallas.1} parent=5 // pred_check
      _
    $region54: #{rcab_pallas.1} parent=5 // pred_check_branch
      %291 = sbr.rel (%p288) target = $region56
    $region55: #{rcab_pallas.1} parent=5 // pred_region
      %s292 = ssub.s32 %s15, 1
      %p293 = scmp.lt.s32.totalorder %s20, 1
      %s294 = scalar_select %p293, %s20, 1
      %s295 = smul.addr %s294, 2
      %s296 = smul.addr %s295, 8
      %s297 = scalar_lea.vmem %s0, %s296
      %p298 = pneg %p41
      %p299 = pneg %p38
      %p300 = pneg %p62
      %p301 = pneg %p59
      %p302 = pneg %p83
      %p303 = pneg %p80
      %p304 = pneg %p104
      %p305 = pneg %p101
      %p306 = pneg %p125
      %p307 = pneg %p122
      %p308 = pneg %p146
      %p309 = pneg %p143
      %p310 = pneg %p167
      %p311 = pneg %p164
      %p312 = pneg %p188
      %p313 = pneg %p185
      %p314 = pneg %p209
      %p315 = pneg %p206
      %p316 = pneg %p235
      %p317 = pneg %p232
      %p318 = scmp.lt.s32.totalorder %s20, 1
      %s319 = scalar_select %p318, %s20, 1
      %s320 = smul.addr %s319, 2
      %s321 = smul.addr %s320, 8
      %s322 = scalar_lea.vmem %s9, %s321
      %p323 = scmp.lt.s32.totalorder %s20, 1
      %s324 = scalar_select %p323, %s20, 1
      %s325 = smul.addr %s324, 2
      %s326 = smul.addr %s325, 8
      %s327 = scalar_lea.vmem %s0, %s326
      %p328 = scmp.lt.s32.totalorder %s20, 1
      %s329 = scalar_select %p328, %s20, 1
      %s330 = smul.addr %s329, 2
      %s331 = smul.addr %s330, 8
      %s332 = scalar_lea.vmem %s9, %s331
      %v334 = vlaneseq
      %v335 = vand.u32 %v334, 127
      %v336 = vadd.s32 %v335, 128
      %v337 = vadd.s32 %v335, 256
      %v338 = vadd.s32 %v335, 15
      %v339 = vadd.s32 %v336, 15
      %v340 = vadd.s32 %v337, 15
      %vm341 = vcmp.lt.s32.totalorder %v338, 0
      %v342 = vsub.s32 0, %v338
      %v343 = vsel %vm341, %v342, %v338
      %v344 = vshrl.u32 %v343, 4
      %v345 = vand.u32 %v343, 15
      %v346 = vsub.s32 0, %v345
      %v347 = vsel %vm341, %v346, %v345
      %vm348 = vcmp.lt.s32.totalorder %v339, 0
      %v349 = vsub.s32 0, %v339
      %v350 = vsel %vm348, %v349, %v339
      %v351 = vshrl.u32 %v350, 4
      %v352 = vand.u32 %v350, 15
      %v353 = vsub.s32 0, %v352
      %v354 = vsel %vm348, %v353, %v352
      %vm355 = vcmp.lt.s32.totalorder %v340, 0
      %v356 = vsub.s32 0, %v340
      %v357 = vsel %vm355, %v356, %v340
      %v358 = vshrl.u32 %v357, 4
      %v359 = vand.u32 %v357, 15
      %v360 = vsub.s32 0, %v359
      %v361 = vsel %vm355, %v360, %v359
      %vm362 = vcmp.ne.s32.totalorder %v347, 0
      %vm363 = vcmp.ne.s32.totalorder %v354, 0
      %vm364 = vcmp.ne.s32.totalorder %v361, 0
      %vm365 = vcmp.lt.s32.totalorder %v347, 0
      %vm366 = vcmp.lt.s32.totalorder %v354, 0
      %vm367 = vcmp.lt.s32.totalorder %v361, 0
      %vm368 = vmand %vm365, %vm362
      %vm369 = vmand %vm366, %vm363
      %vm370 = vmand %vm367, %vm364
      %v371 = vadd.s32 %v347, 16
      %v372 = vadd.s32 %v354, 16
      %v373 = vadd.s32 %v361, 16
      %v374 = vsel %vm368, %v371, %v347
      %v375 = vsel %vm369, %v372, %v354
      %v376 = vsel %vm370, %v373, %v361
      %vm377 = vcmp.ge.s32.totalorder %v374, 1
      %vm378 = vcmp.ge.s32.totalorder %v375, 1
      %vm379 = vcmp.ge.s32.totalorder %v376, 1
      %vm380 = vcmp.le.s32.totalorder %v374, 14
      %vm381 = vcmp.le.s32.totalorder %v375, 14
      %vm382 = vcmp.le.s32.totalorder %v376, 14
      %v383 = vsub.s32 %v335, 17
      %v384 = vsub.s32 %v336, 17
      %v385 = vsub.s32 %v337, 17
      %vm386 = vcmp.ge.s32.totalorder %v383, 0
      %vm387 = vcmp.ge.s32.totalorder %v384, 0
      %vm388 = vcmp.ge.s32.totalorder %v385, 0
      %vm389 = vcmp.lt.s32.totalorder %v383, 0
      %v390 = vsub.s32 0, %v383
      %v391 = vsel %vm389, %v390, %v383
      %v392 = vand.u32 %v391, 65535
      %v393 = vshrl.u32 %v391, 16
      %v395 = vmul.u32 %v392, 14564
      %v396 = vmul.u32 %v392, 58254
      %v397 = vmul.u32 %v393, 14564
      %v398 = vmul.u32 %v393, 58254
      %v399 = vshll.u32 %v396, 16
      %v400 = vshrl.u32 %v396, 16
      %v401 = vshll.u32 %v397, 16
      %v402 = vshrl.u32 %v397, 16
      %vm403 = vc.u32 %v395, %v399
      %v404 = vsel %vm403, 1, 0
      %v405 = vadd.s32 %v395, %v399
      %v406 = vadd.s32 %v398, %v404
      %vm407 = vc.u32 %v405, %v401
      %v408 = vsel %vm407, 1, 0
      %v409 = vadd.s32 %v405, %v401
      %v410 = vadd.s32 %v406, %v408
      %v411 = vadd.s32 %v410, %v400
      %v412 = vadd.s32 %v411, %v402
      %v413 = vshrl.u32 %v412, 8
      %v414 = vmul.u32 %v413, 288
      %v415 = vsub.s32 %v391, %v414
      %v416 = vsub.s32 0, %v415
      %v417 = vsel %vm389, %v416, %v415
      %vm418 = vcmp.lt.s32.totalorder %v384, 0
      %v419 = vsub.s32 0, %v384
      %v420 = vsel %vm418, %v419, %v384
      %v421 = vand.u32 %v420, 65535
      %v422 = vshrl.u32 %v420, 16
      %v424 = vmul.u32 %v421, 14564
      %v425 = vmul.u32 %v421, 58254
      %v426 = vmul.u32 %v422, 14564
      %v427 = vmul.u32 %v422, 58254
      %v428 = vshll.u32 %v425, 16
      %v429 = vshrl.u32 %v425, 16
      %v430 = vshll.u32 %v426, 16
      %v431 = vshrl.u32 %v426, 16
      %vm432 = vc.u32 %v424, %v428
      %v433 = vsel %vm432, 1, 0
      %v434 = vadd.s32 %v424, %v428
      %v435 = vadd.s32 %v427, %v433
      %vm436 = vc.u32 %v434, %v430
      %v437 = vsel %vm436, 1, 0
      %v438 = vadd.s32 %v434, %v430
      %v439 = vadd.s32 %v435, %v437
      %v440 = vadd.s32 %v439, %v429
      %v441 = vadd.s32 %v440, %v431
      %v442 = vshrl.u32 %v441, 8
      %v443 = vmul.u32 %v442, 288
      %v444 = vsub.s32 %v420, %v443
      %v445 = vsub.s32 0, %v444
      %v446 = vsel %vm418, %v445, %v444
      %vm447 = vcmp.lt.s32.totalorder %v385, 0
      %v448 = vsub.s32 0, %v385
      %v449 = vsel %vm447, %v448, %v385
      %v450 = vand.u32 %v449, 65535
      %v451 = vshrl.u32 %v449, 16
      %v453 = vmul.u32 %v450, 14564
      %v454 = vmul.u32 %v450, 58254
      %v455 = vmul.u32 %v451, 14564
      %v456 = vmul.u32 %v451, 58254
      %v457 = vshll.u32 %v454, 16
      %v458 = vshrl.u32 %v454, 16
      %v459 = vshll.u32 %v455, 16
      %v460 = vshrl.u32 %v455, 16
      %vm461 = vc.u32 %v453, %v457
      %v462 = vsel %vm461, 1, 0
      %v463 = vadd.s32 %v453, %v457
      %v464 = vadd.s32 %v456, %v462
      %vm465 = vc.u32 %v463, %v459
      %v466 = vsel %vm465, 1, 0
      %v467 = vadd.s32 %v463, %v459
      %v468 = vadd.s32 %v464, %v466
      %v469 = vadd.s32 %v468, %v458
      %v470 = vadd.s32 %v469, %v460
      %v471 = vshrl.u32 %v470, 8
      %v472 = vmul.u32 %v471, 288
      %v473 = vsub.s32 %v449, %v472
      %v474 = vsub.s32 0, %v473
      %v475 = vsel %vm447, %v474, %v473
      %vm476 = vcmp.ne.s32.totalorder %v417, 0
      %vm477 = vcmp.ne.s32.totalorder %v446, 0
      %vm478 = vcmp.ne.s32.totalorder %v475, 0
      %vm479 = vcmp.lt.s32.totalorder %v417, 0
      %vm480 = vcmp.lt.s32.totalorder %v446, 0
      %vm481 = vcmp.lt.s32.totalorder %v475, 0
      %vm482 = vmand %vm479, %vm476
      %vm483 = vmand %vm480, %vm477
      %vm484 = vmand %vm481, %vm478
      %v485 = vadd.s32 %v417, 288
      %v486 = vadd.s32 %v446, 288
      %v487 = vadd.s32 %v475, 288
      %v488 = vsel %vm482, %v485, %v417
      %v489 = vsel %vm483, %v486, %v446
      %v490 = vsel %vm484, %v487, %v475
      %vm491 = vcmp.lt.s32.totalorder %v488, 256
      %vm492 = vcmp.lt.s32.totalorder %v489, 256
      %vm493 = vcmp.lt.s32.totalorder %v490, 256
      %vm494 = vmand %vm386, %vm491
      %vm495 = vmand %vm387, %vm492
      %vm496 = vmand %vm388, %vm493
      %vm497 = vcmp.lt.s32.totalorder %v335, 0
      %v498 = vsub.s32 0, %v335
      %v499 = vsel %vm497, %v498, %v335
      %v500 = vshrl.u32 %v499, 4
      %v501 = vand.u32 %v499, 15
      %v502 = vsub.s32 0, %v501
      %v503 = vsel %vm497, %v502, %v501
      %vm504 = vcmp.lt.s32.totalorder %v336, 0
      %v505 = vsub.s32 0, %v336
      %v506 = vsel %vm504, %v505, %v336
      %v507 = vshrl.u32 %v506, 4
      %v508 = vand.u32 %v506, 15
      %v509 = vsub.s32 0, %v508
      %v510 = vsel %vm504, %v509, %v508
      %vm511 = vcmp.ne.s32.totalorder %v503, 0
      %vm512 = vcmp.ne.s32.totalorder %v510, 0
      %vm513 = vcmp.lt.s32.totalorder %v503, 0
      %vm514 = vcmp.lt.s32.totalorder %v510, 0
      %vm515 = vmand %vm513, %vm511
      %vm516 = vmand %vm514, %vm512
      %v517 = vadd.s32 %v503, 16
      %v518 = vadd.s32 %v510, 16
      %v519 = vsel %vm515, %v517, %v503
      %v520 = vsel %vm516, %v518, %v510
      %vm521 = vcmp.ge.s32.totalorder %v519, 1
      %vm522 = vcmp.ge.s32.totalorder %v520, 1
      %vm523 = vcmp.le.s32.totalorder %v519, 14
      %vm524 = vcmp.le.s32.totalorder %v520, 14
      %v525 = vld [vmem:[%s1] sm:$0xf]
      %v526 = vld [vmem:[%s3] sm:$0xf]
      %v527 = vld [vmem:[%s2] sm:$0xff]
      %v528 = vld [vmem:[%s4] sm:$0xff]
      %v529 = vld [vmem:[%s5] sm:$0xf]
      %v530 = vld [vmem:[%s6] sm:$0xf]
      %v531 = vld [vmem:[%s7] sm:$0xff]
      %v532 = vld [vmem:[%s8] sm:$0xff]
      %533 = vst [vmem:[#allocation2] sm:$0xff] 0.0
      %534 = vst [vmem:[#allocation2 + $0x8] sm:$0xff] 0.0
      %vm535 = vcmask 556032
      %536 = vst.msk [vmem:[#allocation2 + $0x10] sm:$0xff] %vm535, 0.0
      %v537 = vld [vmem:[%s327] sm:$0xff]
      %v538 = vld [vmem:[%s327 + $0x8] sm:$0xff]
      %541 = vrot.lane.b32.xlu0 %v537, 34
      %v542 = vpop.permute.xlu0 %541
      %543 = vrot.lane.b32.xlu0 %v538, 34
      %v544 = vpop.permute.xlu0 %543
      %vm545 = vcmask 277504
      %v546 = vsel %vm545, %v542, %v544
      %vm550 = vcmask 1047824
      %551 = vst.msk [vmem:[#allocation2] sm:$0xff] %vm550, %v542
      %552 = vst [vmem:[#allocation2 + $0x8] sm:$0xff] %v546
      %553 = vst.msk [vmem:[#allocation2 + $0x10] sm:$0xff] %vm545, %v544
      %v554 = vld [vmem:[#allocation2] sm:$0xff]
      %v555 = vld [vmem:[#allocation2 + $0x8] sm:$0xff]
      %v556 = vld [vmem:[#allocation2 + $0x10] sm:$0xff]
      %v557 = vsel %vm377, 1, 0
      %v558 = vsel %vm378, 1, 0
      %v559 = vsel %vm379, 1, 0
      %vm560 = vcmp.eq.s32.totalorder %v557, 1
      %vm561 = vcmp.eq.s32.totalorder %v558, 1
      %vm562 = vcmp.eq.s32.totalorder %v559, 1
      %v563 = vsel %vm560, %v554, 0.0
      %v564 = vsel %vm561, %v555, 0.0
      %v565 = vsel %vm562, %v556, 0.0
      %v566 = vpack.c.bf16 %v564, %v563
      %v567 = vpack.c.bf16 %v565, %v565
      %568 = vst [vmem:[#allocation3] sm:$0xff] %v566
      %vm569 = vcmask 273408
      %570 = vst.msk [vmem:[#allocation3 + $0x8] sm:$0xf] %vm569, %v567
      %v571 = vld [vmem:[#allocation2] sm:$0xff]
      %v572 = vld [vmem:[#allocation2 + $0x8] sm:$0xff]
      %v573 = vld [vmem:[#allocation2 + $0x10] sm:$0xff]
      %v574 = vpack.c.bf16 %v572, %v571
      %v575 = vpack.c.bf16 %v573, %v573
      %578 = vrot.lane.b32.xlu0 %v574, 127
      %v579 = vpop.permute.xlu0 %578
      %580 = vrot.lane.b32.xlu0 %v575, 127
      %v581 = vpop.permute.xlu0 %580
      %v582 = vrot.slane %v579, 4
      %v583 = vrot.slane %v581, 4
      %vm584 = vcmask 1043456
      %v585 = vsel %vm584, %v582, %v583
      %vm586 = vcmask 1039360
      %v587 = vsel %vm586, %v579, %v585
      %590 = vst [vmem:[#allocation3 + $0xc] sm:$0xff] %v587
      %591 = vst.msk [vmem:[#allocation3 + $0x14] sm:$0xf] %vm569, %v581
      %v592 = vld [vmem:[#allocation2] sm:$0xff]
      %v593 = vld [vmem:[#allocation2 + $0x8] sm:$0xff]
      %v594 = vld [vmem:[#allocation2 + $0x10] sm:$0xff]
      %v595 = vsel %vm380, 1, 0
      %v596 = vsel %vm381, 1, 0
      %v597 = vsel %vm382, 1, 0
      %vm598 = vcmp.eq.s32.totalorder %v595, 1
      %vm599 = vcmp.eq.s32.totalorder %v596, 1
      %vm600 = vcmp.eq.s32.totalorder %v597, 1
      %604 = vrot.lane.b32.xlu0 %v592, 126
      %v605 = vpop.permute.xlu0 %604
      %606 = vrot.lane.b32.xlu0 %v593, 126
      %v607 = vpop.permute.xlu0 %606
      %608 = vrot.lane.b32.xlu0 %v594, 126
      %v609 = vpop.permute.xlu0 %608
      %vm610 = vcmask 1031168
      %v611 = vsel %vm610, %v605, %v607
      %v612 = vsel %vm610, %v607, %v609
      %v616 = vsel %vm598, %v611, 0.0
      %v617 = vsel %vm599, %v612, 0.0
      %v618 = vsel %vm600, %v609, 0.0
      %v619 = vpack.c.bf16 %v617, %v616
      %v620 = vpack.c.bf16 %v618, %v618
      %621 = vst [vmem:[#allocation3 + $0x18] sm:$0xff] %v619
      %622 = vst.msk [vmem:[#allocation3 + $0x20] sm:$0xf] %vm569, %v620
      %v623 = vld [vmem:[#allocation2] sm:$0xff]
      %v624 = vld [vmem:[#allocation2 + $0x8] sm:$0xff]
      %v625 = vld [vmem:[#allocation2 + $0x10] sm:$0xff]
      %629 = vrot.lane.b32.xlu0 %v623, 112
      %v630 = vpop.permute.xlu0 %629
      %631 = vrot.lane.b32.xlu0 %v624, 112
      %v632 = vpop.permute.xlu0 %631
      %633 = vrot.lane.b32.xlu0 %v625, 112
      %v634 = vpop.permute.xlu0 %633
      %vm635 = vcmask 916480
      %v636 = vsel %vm635, %v630, %v632
      %v637 = vsel %vm635, %v632, %v634
      %v641 = vsel %vm560, %v636, 0.0
      %v642 = vsel %vm561, %v637, 0.0
      %v643 = vsel %vm562, %v634, 0.0
      %v644 = vpack.c.bf16 %v642, %v641
      %v645 = vpack.c.bf16 %v643, %v643
      %646 = vst [vmem:[#allocation3 + $0x24] sm:$0xff] %v644
      %647 = vst.msk [vmem:[#allocation3 + $0x2c] sm:$0xf] %vm569, %v645
      %v648 = vld [vmem:[#allocation2] sm:$0xff]
      %v649 = vld [vmem:[#allocation2 + $0x8] sm:$0xff]
      %v650 = vld [vmem:[#allocation2 + $0x10] sm:$0xff]
      %v651 = vpack.c.bf16 %v649, %v648
      %v652 = vpack.c.bf16 %v650, %v650
      %655 = vrot.lane.b32.xlu0 %v651, 111
      %v656 = vpop.permute.xlu0 %655
      %657 = vrot.lane.b32.xlu0 %v652, 111
      %v658 = vpop.permute.xlu0 %657
      %v659 = vrot.slane %v656, 4
      %v660 = vrot.slane %v658, 4
      %v661 = vsel %vm584, %v659, %v660
      %vm662 = vcmask 908288
      %v663 = vsel %vm662, %v656, %v661
      %666 = vst [vmem:[#allocation3 + $0x30] sm:$0xff] %v663
      %667 = vst.msk [vmem:[#allocation3 + $0x38] sm:$0xf] %vm569, %v658
      %v668 = vld [vmem:[#allocation2] sm:$0xff]
      %v669 = vld [vmem:[#allocation2 + $0x8] sm:$0xff]
      %v670 = vld [vmem:[#allocation2 + $0x10] sm:$0xff]
      %674 = vrot.lane.b32.xlu0 %v668, 110
      %v675 = vpop.permute.xlu0 %674
      %676 = vrot.lane.b32.xlu0 %v669, 110
      %v677 = vpop.permute.xlu0 %676
      %678 = vrot.lane.b32.xlu0 %v670, 110
      %v679 = vpop.permute.xlu0 %678
      %vm680 = vcmask 900096
      %v681 = vsel %vm680, %v675, %v677
      %v682 = vsel %vm680, %v677, %v679
      %v686 = vsel %vm598, %v681, 0.0
      %v687 = vsel %vm599, %v682, 0.0
      %v688 = vsel %vm600, %v679, 0.0
      %v689 = vpack.c.bf16 %v687, %v686
      %v690 = vpack.c.bf16 %v688, %v688
      %691 = vst [vmem:[#allocation3 + $0x3c] sm:$0xff] %v689
      %692 = vst.msk [vmem:[#allocation3 + $0x44] sm:$0xf] %vm569, %v690
      %v693 = vld [vmem:[#allocation2] sm:$0xff]
      %v694 = vld [vmem:[#allocation2 + $0x8] sm:$0xff]
      %v695 = vld [vmem:[#allocation2 + $0x10] sm:$0xff]
      %699 = vrot.lane.b32.xlu0 %v693, 96
      %v700 = vpop.permute.xlu0 %699
      %701 = vrot.lane.b32.xlu0 %v694, 96
      %v702 = vpop.permute.xlu0 %701
      %703 = vrot.lane.b32.xlu0 %v695, 96
      %v704 = vpop.permute.xlu0 %703
      %vm705 = vcmask 785408
      %v706 = vsel %vm705, %v700, %v702
      %v707 = vsel %vm705, %v702, %v704
      %v711 = vsel %vm560, %v706, 0.0
      %v712 = vsel %vm561, %v707, 0.0
      %v713 = vsel %vm562, %v704, 0.0
      %v714 = vpack.c.bf16 %v712, %v711
      %v715 = vpack.c.bf16 %v713, %v713
      %716 = vst [vmem:[#allocation3 + $0x48] sm:$0xff] %v714
      %717 = vst.msk [vmem:[#allocation3 + $0x50] sm:$0xf] %vm569, %v715
      %v718 = vld [vmem:[#allocation2] sm:$0xff]
      %v719 = vld [vmem:[#allocation2 + $0x8] sm:$0xff]
      %v720 = vld [vmem:[#allocation2 + $0x10] sm:$0xff]
      %v721 = vpack.c.bf16 %v719, %v718
      %v722 = vpack.c.bf16 %v720, %v720
      %725 = vrot.lane.b32.xlu0 %v721, 95
      %v726 = vpop.permute.xlu0 %725
      %727 = vrot.lane.b32.xlu0 %v722, 95
      %v728 = vpop.permute.xlu0 %727
      %v729 = vrot.slane %v726, 4
      %v730 = vrot.slane %v728, 4
      %v731 = vsel %vm584, %v729, %v730
      %vm732 = vcmask 777216
      %v733 = vsel %vm732, %v726, %v731
      %736 = vst [vmem:[#allocation3 + $0x54] sm:$0xff] %v733
      %737 = vst.msk [vmem:[#allocation3 + $0x5c] sm:$0xf] %vm569, %v728
      %v738 = vld [vmem:[#allocation2] sm:$0xff]
      %v739 = vld [vmem:[#allocation2 + $0x8] sm:$0xff]
      %v740 = vld [vmem:[#allocation2 + $0x10] sm:$0xff]
      %744 = vrot.lane.b32.xlu0 %v738, 94
      %v745 = vpop.permute.xlu0 %744
      %746 = vrot.lane.b32.xlu0 %v739, 94
      %v747 = vpop.permute.xlu0 %746
      %748 = vrot.lane.b32.xlu0 %v740, 94
      %v749 = vpop.permute.xlu0 %748
      %vm750 = vcmask 769024
      %v751 = vsel %vm750, %v745, %v747
      %v752 = vsel %vm750, %v747, %v749
      %v756 = vsel %vm598, %v751, 0.0
      %v757 = vsel %vm599, %v752, 0.0
      %v758 = vsel %vm600, %v749, 0.0
      %v759 = vpack.c.bf16 %v757, %v756
      %v760 = vpack.c.bf16 %v758, %v758
      %761 = vst [vmem:[#allocation3 + $0x60] sm:$0xff] %v759
      %762 = vst.msk [vmem:[#allocation3 + $0x68] sm:$0xf] %vm569, %v760
      %v763 = vld [vmem:[#allocation3] sm:$0xff]
      %v764 = vld [vmem:[#allocation3 + $0x8] sm:$0xf]
      %v765 = vld [vmem:[#allocation3 + $0xc] sm:$0xff]
      %v766 = vld [vmem:[#allocation3 + $0x14] sm:$0xf]
      %v767 = vld [vmem:[#allocation3 + $0x18] sm:$0xff]
      %v768 = vld [vmem:[#allocation3 + $0x20] sm:$0xf]
      %v769 = vld [vmem:[#allocation3 + $0x24] sm:$0xff]
      %v770 = vld [vmem:[#allocation3 + $0x2c] sm:$0xf]
      %v771 = vld [vmem:[#allocation3 + $0x30] sm:$0xff]
      %v772 = vld [vmem:[#allocation3 + $0x38] sm:$0xf]
      %v773 = vld [vmem:[#allocation3 + $0x3c] sm:$0xff]
      %v774 = vld [vmem:[#allocation3 + $0x44] sm:$0xf]
      %v775 = vld [vmem:[#allocation3 + $0x48] sm:$0xff]
      %v776 = vld [vmem:[#allocation3 + $0x50] sm:$0xf]
      %v777 = vld [vmem:[#allocation3 + $0x54] sm:$0xff]
      %v778 = vld [vmem:[#allocation3 + $0x5c] sm:$0xf]
      %v779 = vld [vmem:[#allocation3 + $0x60] sm:$0xff]
      %v780 = vld [vmem:[#allocation3 + $0x68] sm:$0xf]
      %782 = vset.pattern.permute.xlu0 0
      %783 = vperm.xlu0 %782, %v527
      %v784 = vpop.permute.xlu0 %783
      %v804 = vunpack.c.l.b16 %v763
      %v805 = vunpack.c.h.b16 %v763
      %v806 = vunpack.c.l.b16 %v764
      %v807 = vunpack.c.l.b16 %v765
      %v808 = vunpack.c.h.b16 %v765
      %v809 = vunpack.c.l.b16 %v766
      %v810 = vunpack.c.l.b16 %v767
      %v811 = vunpack.c.h.b16 %v767
      %v812 = vunpack.c.l.b16 %v768
      %v813 = vunpack.c.l.b16 %v769
      %v814 = vunpack.c.h.b16 %v769
      %v815 = vunpack.c.l.b16 %v770
      %v816 = vunpack.c.l.b16 %v771
      %v817 = vunpack.c.h.b16 %v771
      %v818 = vunpack.c.l.b16 %v772
      %v819 = vunpack.c.l.b16 %v773
      %v820 = vunpack.c.h.b16 %v773
      %v821 = vunpack.c.l.b16 %v774
      %v822 = vunpack.c.l.b16 %v775
      %v823 = vunpack.c.h.b16 %v775
      %v824 = vunpack.c.l.b16 %v776
      %v825 = vunpack.c.l.b16 %v777
      %v826 = vunpack.c.h.b16 %v777
      %v827 = vunpack.c.l.b16 %v778
      %v828 = vunpack.c.l.b16 %v779
      %v829 = vunpack.c.h.b16 %v779
      %v830 = vunpack.c.l.b16 %v780
      %v831 = vpack.c.b16 %v807, %v804
      %v832 = vpack.c.b16 %v808, %v805
      %v833 = vpack.c.b16 %v809, %v806
      %v834 = vpack.c.b16 %v813, %v810
      %v835 = vpack.c.b16 %v814, %v811
      %v836 = vpack.c.b16 %v815, %v812
      %v837 = vpack.c.b16 %v819, %v816
      %v838 = vpack.c.b16 %v820, %v817
      %v839 = vpack.c.b16 %v821, %v818
      %v840 = vpack.c.b16 %v825, %v822
      %v841 = vpack.c.b16 %v826, %v823
      %v842 = vpack.c.b16 %v827, %v824
      %v843 = vpack.c.b16 %v828, %v828
      %v844 = vpack.c.b16 %v829, %v829
      %v845 = vpack.c.b16 %v830, %v830
      %vm858 = vcmask 588800
      %v860 = vsel %vm858, %v525, 0
      %vm862 = vcmask 1043456
      %v864 = vsel %vm862, %v843, 0
      %v867 = vsel %vm862, %v844, 0
      %v870 = vsel %vm862, %v845, 0
      %872 = vmatpush.bf16.msra.mxu0 0
      %873 = vmatpush.bf16.msra.mxu0 0
      %874 = vmatpush.bf16.msra.mxu0 0
      %875 = vmatpush.bf16.msra.mxu0 %v864
      %876 = vmatpush.bf16.msra.mxu0 %v840
      %877 = vmatpush.bf16.msra.mxu0 %v837
      %878 = vmatpush.bf16.msra.mxu0 %v834
      %879 = vmatpush.bf16.msra.mxu0 %v831
      %880 = vmatmul.bf16.gmra.mxu0 %v860
      %v881 = vpop.f32.mrf.mxu0
      %v882 = vadd.f32 %v784, %v881
      %v883 = vpop.f32.mrf.mxu0
      %884 = vdwg.mxu0
      %885 = vmatpush.bf16.msra.mxu0 0
      %886 = vmatpush.bf16.msra.mxu0 0
      %887 = vmatpush.bf16.msra.mxu0 0
      %888 = vmatpush.bf16.msra.mxu0 %v867
      %889 = vmatpush.bf16.msra.mxu0 %v841
      %890 = vmatpush.bf16.msra.mxu0 %v838
      %891 = vmatpush.bf16.msra.mxu0 %v835
      %892 = vmatpush.bf16.msra.mxu0 %v832
      %893 = vmatmul.bf16.gmra.mxu0 %v860
      %v894 = vpop.f32.mrf.mxu0
      %v895 = vadd.f32 %v784, %v894
      %v896 = vpop.f32.mrf.mxu0
      %897 = vdwg.mxu0
      %898 = vmatpush.bf16.msra.mxu0 0
      %899 = vmatpush.bf16.msra.mxu0 0
      %900 = vmatpush.bf16.msra.mxu0 0
      %901 = vmatpush.bf16.msra.mxu0 %v870
      %902 = vmatpush.bf16.msra.mxu0 %v842
      %903 = vmatpush.bf16.msra.mxu0 %v839
      %904 = vmatpush.bf16.msra.mxu0 %v836
      %905 = vmatpush.bf16.msra.mxu0 %v833
      %906 = vmatmul.bf16.gmra.mxu0 %v860
      %v907 = vpop.f32.mrf.mxu0
      %v908 = vadd.f32 %v784, %v907
      %v909 = vpop.f32.mrf.mxu0
      %910 = vdwg.mxu0
      %vm911 = vcmp.gt.f32.partialorder %v882, 0.0
      %vm912 = vcmp.gt.f32.partialorder %v895, 0.0
      %vm913 = vcmp.gt.f32.partialorder %v908, 0.0
      %v914 = vmul.f32 %v882, 0.1
      %v915 = vmul.f32 %v895, 0.1
      %v916 = vmul.f32 %v908, 0.1
      %v917 = vsel %vm911, %v882, %v914
      %v918 = vsel %vm912, %v895, %v915
      %v919 = vsel %vm913, %v908, %v916
      %v920 = vsel %vm494, 1, 0
      %v921 = vsel %vm495, 1, 0
      %v922 = vsel %vm496, 1, 0
      %vm923 = vcmp.eq.s32.totalorder %v920, 1
      %vm924 = vcmp.eq.s32.totalorder %v921, 1
      %vm925 = vcmp.eq.s32.totalorder %v922, 1
      %v926 = vsel %vm923, %v917, 0.0
      %v927 = vsel %vm924, %v918, 0.0
      %v928 = vsel %vm925, %v919, 0.0
      %v929 = vsel %vm521, 1, 0
      %v930 = vsel %vm522, 1, 0
      %vm931 = vcmp.eq.s32.totalorder %v929, 1
      %vm932 = vcmp.eq.s32.totalorder %v930, 1
      %v933 = vsel %vm931, %v926, 0.0
      %v934 = vsel %vm932, %v927, 0.0
      %v935 = vpack.c.bf16 %v934, %v933
      %936 = vst [vmem:[#allocation3] sm:$0xff] %v935
      %v937 = vpack.c.bf16 %v927, %v926
      %v938 = vpack.c.bf16 %v928, %v928
      %941 = vrot.lane.b32.xlu0 %v937, 127
      %v942 = vpop.permute.xlu0 %941
      %943 = vrot.lane.b32.xlu0 %v938, 127
      %v944 = vpop.permute.xlu0 %943
      %v945 = vrot.slane %v942, 4
      %v946 = vrot.slane %v944, 4
      %v947 = vsel %vm584, %v945, %v946
      %v948 = vsel %vm586, %v942, %v947
      %950 = vst [vmem:[#allocation3 + $0xc] sm:$0xff] %v948
      %v951 = vsel %vm523, 1, 0
      %v952 = vsel %vm524, 1, 0
      %vm953 = vcmp.eq.s32.totalorder %v951, 1
      %vm954 = vcmp.eq.s32.totalorder %v952, 1
      %958 = vrot.lane.b32.xlu0 %v926, 126
      %v959 = vpop.permute.xlu0 %958
      %960 = vrot.lane.b32.xlu0 %v927, 126
      %v961 = vpop.permute.xlu0 %960
      %962 = vrot.lane.b32.xlu0 %v928, 126
      %v963 = vpop.permute.xlu0 %962
      %v964 = vsel %vm610, %v959, %v961
      %v965 = vsel %vm610, %v961, %v963
      %v968 = vsel %vm953, %v964, 0.0
      %v969 = vsel %vm954, %v965, 0.0
      %v970 = vpack.c.bf16 %v969, %v968
      %971 = vst [vmem:[#allocation3 + $0x18] sm:$0xff] %v970
      %972 = vrot.lane.b32.xlu0 %v926, 112
      %v973 = vpop.permute.xlu0 %972
      %974 = vrot.lane.b32.xlu0 %v927, 112
      %v975 = vpop.permute.xlu0 %974
      %976 = vrot.lane.b32.xlu0 %v928, 112
      %v977 = vpop.permute.xlu0 %976
      %v978 = vsel %vm635, %v973, %v975
      %v979 = vsel %vm635, %v975, %v977
      %v982 = vsel %vm931, %v978, 0.0
      %v983 = vsel %vm932, %v979, 0.0
      %v984 = vpack.c.bf16 %v983, %v982
      %985 = vst [vmem:[#allocation3 + $0x24] sm:$0xff] %v984
      %986 = vrot.lane.b32.xlu0 %v937, 111
      %v987 = vpop.permute.xlu0 %986
      %988 = vrot.lane.b32.xlu0 %v938, 111
      %v989 = vpop.permute.xlu0 %988
      %v990 = vrot.slane %v987, 4
      %v991 = vrot.slane %v989, 4
      %v992 = vsel %vm584, %v990, %v991
      %v993 = vsel %vm662, %v987, %v992
      %995 = vst [vmem:[#allocation3 + $0x30] sm:$0xff] %v993
      %996 = vrot.lane.b32.xlu0 %v926, 110
      %v997 = vpop.permute.xlu0 %996
      %998 = vrot.lane.b32.xlu0 %v927, 110
      %v999 = vpop.permute.xlu0 %998
      %1000 = vrot.lane.b32.xlu0 %v928, 110
      %v1001 = vpop.permute.xlu0 %1000
      %v1002 = vsel %vm680, %v997, %v999
      %v1003 = vsel %vm680, %v999, %v1001
      %v1006 = vsel %vm953, %v1002, 0.0
      %v1007 = vsel %vm954, %v1003, 0.0
      %v1008 = vpack.c.bf16 %v1007, %v1006
      %1009 = vst [vmem:[#allocation3 + $0x3c] sm:$0xff] %v1008
      %1010 = vrot.lane.b32.xlu0 %v926, 96
      %v1011 = vpop.permute.xlu0 %1010
      %1012 = vrot.lane.b32.xlu0 %v927, 96
      %v1013 = vpop.permute.xlu0 %1012
      %1014 = vrot.lane.b32.xlu0 %v928, 96
      %v1015 = vpop.permute.xlu0 %1014
      %v1016 = vsel %vm705, %v1011, %v1013
      %v1017 = vsel %vm705, %v1013, %v1015
      %v1020 = vsel %vm931, %v1016, 0.0
      %v1021 = vsel %vm932, %v1017, 0.0
      %v1022 = vpack.c.bf16 %v1021, %v1020
      %1023 = vst [vmem:[#allocation3 + $0x48] sm:$0xff] %v1022
      %1024 = vrot.lane.b32.xlu0 %v937, 95
      %v1025 = vpop.permute.xlu0 %1024
      %1026 = vrot.lane.b32.xlu0 %v938, 95
      %v1027 = vpop.permute.xlu0 %1026
      %v1028 = vrot.slane %v1025, 4
      %v1029 = vrot.slane %v1027, 4
      %v1030 = vsel %vm584, %v1028, %v1029
      %v1031 = vsel %vm732, %v1025, %v1030
      %1033 = vst [vmem:[#allocation3 + $0x54] sm:$0xff] %v1031
      %1034 = vrot.lane.b32.xlu0 %v926, 94
      %v1035 = vpop.permute.xlu0 %1034
      %1036 = vrot.lane.b32.xlu0 %v927, 94
      %v1037 = vpop.permute.xlu0 %1036
      %1038 = vrot.lane.b32.xlu0 %v928, 94
      %v1039 = vpop.permute.xlu0 %1038
      %v1040 = vsel %vm750, %v1035, %v1037
      %v1041 = vsel %vm750, %v1037, %v1039
      %v1044 = vsel %vm953, %v1040, 0.0
      %v1045 = vsel %vm954, %v1041, 0.0
      %v1046 = vpack.c.bf16 %v1045, %v1044
      %1047 = vst [vmem:[#allocation3 + $0x60] sm:$0xff] %v1046
      %v1048 = vld [vmem:[#allocation3] sm:$0xff]
      %v1049 = vld [vmem:[#allocation3 + $0xc] sm:$0xff]
      %v1050 = vld [vmem:[#allocation3 + $0x18] sm:$0xff]
      %v1051 = vld [vmem:[#allocation3 + $0x24] sm:$0xff]
      %v1052 = vld [vmem:[#allocation3 + $0x30] sm:$0xff]
      %v1053 = vld [vmem:[#allocation3 + $0x3c] sm:$0xff]
      %v1054 = vld [vmem:[#allocation3 + $0x48] sm:$0xff]
      %v1055 = vld [vmem:[#allocation3 + $0x54] sm:$0xff]
      %v1056 = vld [vmem:[#allocation3 + $0x60] sm:$0xff]
      %1058 = vset.pattern.permute.xlu0 0
      %1059 = vperm.xlu0 %1058, %v528
      %v1060 = vpop.permute.xlu0 %1059
      %v1071 = vunpack.c.l.b16 %v1048
      %v1072 = vunpack.c.h.b16 %v1048
      %v1073 = vunpack.c.l.b16 %v1049
      %v1074 = vunpack.c.h.b16 %v1049
      %v1075 = vunpack.c.l.b16 %v1050
      %v1076 = vunpack.c.h.b16 %v1050
      %v1077 = vunpack.c.l.b16 %v1051
      %v1078 = vunpack.c.h.b16 %v1051
      %v1079 = vunpack.c.l.b16 %v1052
      %v1080 = vunpack.c.h.b16 %v1052
      %v1081 = vunpack.c.l.b16 %v1053
      %v1082 = vunpack.c.h.b16 %v1053
      %v1083 = vunpack.c.l.b16 %v1054
      %v1084 = vunpack.c.h.b16 %v1054
      %v1085 = vunpack.c.l.b16 %v1055
      %v1086 = vunpack.c.h.b16 %v1055
      %v1087 = vunpack.c.l.b16 %v1056
      %v1088 = vunpack.c.h.b16 %v1056
      %v1089 = vpack.c.b16 %v1073, %v1071
      %v1090 = vpack.c.b16 %v1074, %v1072
      %v1091 = vpack.c.b16 %v1077, %v1075
      %v1092 = vpack.c.b16 %v1078, %v1076
      %v1093 = vpack.c.b16 %v1081, %v1079
      %v1094 = vpack.c.b16 %v1082, %v1080
      %v1095 = vpack.c.b16 %v1085, %v1083
      %v1096 = vpack.c.b16 %v1086, %v1084
      %v1097 = vpack.c.b16 %v1087, %v1087
      %v1098 = vpack.c.b16 %v1088, %v1088
      %v1108 = vsel %vm858, %v526, 0
      %v1111 = vsel %vm862, %v1097, 0
      %v1114 = vsel %vm862, %v1098, 0
      %1116 = vmatpush.bf16.msra.mxu0 0
      %1117 = vmatpush.bf16.msra.mxu0 0
      %1118 = vmatpush.bf16.msra.mxu0 0
      %1119 = vmatpush.bf16.msra.mxu0 %v1111
      %1120 = vmatpush.bf16.msra.mxu0 %v1095
      %1121 = vmatpush.bf16.msra.mxu0 %v1093
      %1122 = vmatpush.bf16.msra.mxu0 %v1091
      %1123 = vmatpush.bf16.msra.mxu0 %v1089
      %1124 = vmatmul.bf16.gmra.mxu0 %v1108
      %v1125 = vpop.f32.mrf.mxu0
      %v1126 = vadd.f32 %v1060, %v1125
      %v1127 = vpop.f32.mrf.mxu0
      %1128 = vdwg.mxu0
      %1129 = vmatpush.bf16.msra.mxu0 0
      %1130 = vmatpush.bf16.msra.mxu0 0
      %1131 = vmatpush.bf16.msra.mxu0 0
      %1132 = vmatpush.bf16.msra.mxu0 %v1114
      %1133 = vmatpush.bf16.msra.mxu0 %v1096
      %1134 = vmatpush.bf16.msra.mxu0 %v1094
      %1135 = vmatpush.bf16.msra.mxu0 %v1092
      %1136 = vmatpush.bf16.msra.mxu0 %v1090
      %1137 = vmatmul.bf16.gmra.mxu0 %v1108
      %v1138 = vpop.f32.mrf.mxu0
      %v1139 = vadd.f32 %v1060, %v1138
      %v1140 = vpop.f32.mrf.mxu0
      %1141 = vdwg.mxu0
      %v1142 = vadd.f32 %v1126, %v1139
      %1143 = vadd.xlane.f32.xlu0 %v1142
      %v1144 = vpop.xlane.xlu0 %1143
      %v1145 = vrcp.pop 256.0
      %v1146 = vmul.f32 256.0, %v1145
      %v1147 = vsub.f32 1.0, %v1146
      %v1148 = vmul.f32 %v1145, %v1147
      %v1149 = vadd.f32 %v1145, %v1148
      %vm1150 = vweird.f32 %v1145
      %v1151 = vsel %vm1150, %v1145, %v1149
      %v1152 = vmul.f32 %v1144, %v1151
      %vm1153 = vcmask 64512
      %v1155 = vsel %vm1153, %v529, 0
      %1157 = vmatpush.msra.mxu0 0.0
      %1158 = vmatpush.msra.mxu0 0.0
      %1159 = vmatpush.msra.mxu0 0.0
      %1160 = vmatpush.msra.mxu0 0.0
      %1161 = vmatpush.msra.mxu0 0.0
      %1162 = vmatpush.msra.mxu0 0.0
      %1163 = vmatpush.msra.mxu0 0.0
      %1164 = vmatpush.msra.mxu0 0.0
      %1165 = vmatpush.msra.mxu0 0.0
      %1166 = vmatpush.msra.mxu0 0.0
      %1167 = vmatpush.msra.mxu0 0.0
      %1168 = vmatpush.msra.mxu0 0.0
      %1169 = vmatpush.msra.mxu0 0.0
      %1170 = vmatpush.msra.mxu0 0.0
      %1171 = vmatpush.msra.mxu0 0.0
      %1172 = vmatpush.msra.mxu0 %v1152
      %1173 = vmatmul.f32.gmra.mxu0 %v1155
      %v1174 = vpop.f32.mrf.mxu0
      %v1175 = vadd.f32 %v530, %v1174
      %1176 = vdwg.mxu0
      %vm1177 = vcmp.gt.f32.partialorder %v1175, 0.0
      %v1178 = vmul.f32 %v1175, 0.1
      %v1179 = vsel %vm1177, %v1175, %v1178
      %vm1180 = vcmask 31744
      %v1182 = vsel %vm1180, %v531, 0
      %v1185 = vsel %vm862, %v1179, 0
      %1187 = vmatpush.msra.mxu0 0.0
      %1188 = vmatpush.msra.mxu0 0.0
      %1189 = vmatpush.msra.mxu0 0.0
      %1190 = vmatpush.msra.mxu0 0.0
      %1191 = vmatpush.msra.mxu0 0.0
      %1192 = vmatpush.msra.mxu0 0.0
      %1193 = vmatpush.msra.mxu0 0.0
      %1194 = vmatpush.msra.mxu0 0.0
      %1195 = vmatpush.msra.mxu0 0.0
      %1196 = vmatpush.msra.mxu0 0.0
      %1197 = vmatpush.msra.mxu0 0.0
      %1198 = vmatpush.msra.mxu0 0.0
      %1199 = vmatpush.msra.mxu0 0.0
      %1200 = vmatpush.msra.mxu0 0.0
      %1201 = vmatpush.msra.mxu0 0.0
      %1202 = vmatpush.msra.mxu0 %v1185
      %1203 = vmatmul.f32.gmra.mxu0 %v1182
      %v1204 = vpop.f32.mrf.mxu0
      %v1205 = vadd.f32 %v532, %v1204
      %1206 = vdwg.mxu0
      %v1207 = vxor.u32 %v1205, 2147483648
      %v1208 = vmul.f32 %v1207, 1.442695
      %v1209 = vpow.pop %v1208
      %v1210 = vadd.f32 %v1209, 1.0
      %v1211 = vrcp.pop %v1210
      %v1212 = vmul.f32 %v1210, %v1211
      %v1213 = vsub.f32 1.0, %v1212
      %v1214 = vmul.f32 %v1211, %v1213
      %v1215 = vadd.f32 %v1211, %v1214
      %vm1216 = vweird.f32 %v1210
      %vm1217 = vweird.f32 %v1211
      %vm1218 = vmor %vm1216, %vm1217
      %v1219 = vsel %vm1218, %v1211, %v1215
      %v1220 = vand.u32 2147483647, %v1210
      %vm1221 = vcmp.eq.f32.partialorder %v1220, 8.507059e+37
      %v1222 = vand.u32 %v1210, 2147483648
      %v1223 = vor.u32 1.1754944e-38, %v1222
      %v1224 = vsel %vm1221, %v1223, %v1219
      %v1225 = vmul.f32 1.0, %v1224
      %1227 = vset.pattern.permute.xlu0 0
      %1228 = vperm.xlu0 %1227, %v1225
      %v1229 = vpop.permute.xlu0 %1228
      %v1231 = vmul.f32 %v1126, %v1229
      %v1232 = vmul.f32 %v1139, %v1229
      %v1233 = vld [vmem:[%s327] sm:$0xff]
      %v1234 = vld [vmem:[%s327 + $0x8] sm:$0xff]
      %v1235 = vadd.f32 %v1231, %v1233
      %v1236 = vadd.f32 %v1232, %v1234
      %1237 = vst [vmem:[%s332] sm:$0xff] %v1235
      %1238 = vst [vmem:[%s332 + $0x8] sm:$0xff] %v1236
      %p1239 = scmp.lt.s32.totalorder %s20, 1
      %s1240 = scalar_select %p1239, %s20, 1
      %s1241 = smul.addr %s1240, 2
      %s1242 = smul.addr %s1241, 8
      %s1243 = scalar_lea.vmem %s9, %s1242
      // Predicated region
      $region57: #{rcab_pallas.1} parent=55 // pred_check
        %p1244 = pneg %p232
      $region58: #{rcab_pallas.1} parent=55 // pred_check_branch
        %1246 = sbr.rel (%p1244) target = $region60
      $region59: #{rcab_pallas.1} parent=55 // pred_region
        _
      $region60: #{rcab_pallas.1} parent=55 // pred_fallthru
        _
    $region56: #{rcab_pallas.1} parent=5 // pred_fallthru
      _
    %p1247 = scmp.le.s32.totalorder 2, %s15
    // Predicated region
    $region61: #{rcab_pallas.1} parent=5 // pred_check
      %p1248 = pneg %p1247
    $region62: #{rcab_pallas.1} parent=5 // pred_check_branch
      %1250 = sbr.rel (%p1248) target = $region64
    $region63: #{rcab_pallas.1} parent=5 // pred_region
      %s1251 = ssub.s32 %s15, 2
      // Predicated region
      $region65: #{rcab_pallas.1} parent=63 // pred_check
        %p1252 = pneg %p238
      $region66: #{rcab_pallas.1} parent=63 // pred_check_branch
        %1254 = sbr.rel (%p1252) target = $region68
      $region67: #{rcab_pallas.1} parent=63 // pred_region
        %p1255 = scmp.lt.s32.totalorder %s21, 1
        %s1256 = scalar_select %p1255, %s21, 1
        %s1257 = smul.addr %s1256, 2
        %s1258 = smul.addr %s1257, 8
        %s1259 = scalar_lea.vmem %s9, %s1258
      $region68: #{rcab_pallas.1} parent=63 // pred_fallthru
        _
    $region64: #{rcab_pallas.1} parent=5 // pred_fallthru
      _
  $region6: #{rcab_pallas.1} parent=0 // loop_footer
    %s19 = sadd.s32 1, %s15
  $region7: #{rcab_pallas.1} parent=0 // loop_footer_branch
    %14 = sbr.rel target = $region3
  $region8: #{rcab_pallas.1} parent=0 // loop_exit
    _

</llo_original>
